<compile_context>
chip_gen: v7x
topology: tpu7x:2x2x1
jax: 0.10.0
libtpu: 0.0.40
codegen_flags: <defaults>
</compile_context>

<pallas_src>
import functools

import jax
import jax.numpy as jnp
from jax.experimental import pallas as pl
from jax.experimental.pallas import tpu as pltpu

NUM_CROSS = 3   # num_crossing_layers
LANE = 128
VMEM_BUDGET = 48 * 1024 * 1024   # per-core budget; v7x has 64 MiB/TC


def _round_up(x, m):
    return (x + m - 1) // m * m


def _pad2(a, rows, cols):
    if a.shape == (rows, cols):
        return a
    return jnp.pad(a, ((0, rows - a.shape[0]), (0, cols - a.shape[1])))


def dcn_kernel(x_ref, lr_ref, wf_ref, bf_ref, wc_ref, bc_ref,
               w2_ref, b2_ref, w3_ref, b3_ref,
               fcw_c_ref, fcw_d_ref, bias_ref, out_ref, *, mxu_dtype, dp):
    x0 = x_ref[...]                                       # [TB, Dp] f32, padded cols = 0
    x0_m = x0.astype(mxu_dtype)                           # hoisted single cast (reused)

    # ---- fused: first cross matmul + first DNN layer share LHS x0 -> one wide dot ----
    y0 = jnp.dot(x0_m, wf_ref[...],
                 preferred_element_type=jnp.float32) + bf_ref[...]   # [TB, Dp + H1p]
    xw = y0[:, :dp]                                       # cross layer 0 pre-activation
    h = jnp.maximum(y0[:, dp:], 0.0)                      # DNN layer 1 output
    xi = x0 + x0 * xw                                     # x1 = x0 + x0 * (x0 @ W0 + b0)

    # ---- remaining CrossNetV2 layers: x_{i+1} = x_i + x0 * (x_i @ W_i + b_i) ----
    for l in range(NUM_CROSS - 1):
        xw = jnp.dot(xi.astype(mxu_dtype), wc_ref[l],
                     preferred_element_type=jnp.float32) + bc_ref[l]
        xi = xi + x0 * xw                                 # VPU; padded cols stay 0

    # ---- remaining parallel DNN tower layers ----
    h = jnp.maximum(jnp.dot(h.astype(mxu_dtype), w2_ref[...],
                            preferred_element_type=jnp.float32) + b2_ref[...], 0.0)
    h = jnp.maximum(jnp.dot(h.astype(mxu_dtype), w3_ref[...],
                            preferred_element_type=jnp.float32) + b3_ref[...], 0.0)

    # ---- final fc over concat([cross_out, dnn_out]): N=1 matvec on VPU/XLU,
    #      wide/LR sum and folded (fcb + lrb) bias fused into the same chain ----
    logit = (jnp.sum(xi * fcw_c_ref[...], axis=-1, keepdims=True)
             + jnp.sum(h * fcw_d_ref[...], axis=-1, keepdims=True)
             + jnp.sum(lr_ref[...], axis=-1, keepdims=True)
             + bias_ref[0])                               # [TB, 1]

    # Lane-dense store: one unmasked (1, TB) row per grid step (transpose rides XLU).
    out_ref[...] = jax.nn.sigmoid(logit).T                # [1, TB]


def _choose_block_b(B, Dp, Dwp, weight_bytes, block_b_max):
    """Adaptive batch tile: big enough to amortize per-step overhead & fill the MXU,
    small enough to (a) leave >= 2 grid steps for v7x's 2 TCs, (b) fit VMEM budget."""
    Bp128 = _round_up(max(B, 1), LANE)
    block_b = min(_round_up(block_b_max, LANE), Bp128)
    # keep at least 2 tiles whenever the batch allows it (v7x dual-core load balance)
    if Bp128 >= 2 * LANE and Bp128 // block_b < 2:
        block_b = max(LANE, ((Bp128 // 2) // LANE) * LANE)

    def footprint(tb):
        streamed = 2 * tb * (Dp + Dwp) * 4 + 2 * tb * 4   # double-buffered in + out
        return weight_bytes + streamed

    while block_b > LANE and footprint(block_b) > VMEM_BUDGET:
        block_b = max(LANE, ((block_b // 2) // LANE) * LANE)
    return block_b, footprint(block_b)


def dcn_forward(feature_map, lr_feature_map, wc, bc,
                w1, b1, w2, b2, w3, b3, fcw, fcb, lrb,
                *, block_b_max=1024, mxu_dtype=jnp.bfloat16):
    B, D = feature_map.shape
    Dw = lr_feature_map.shape[1]
    H1, H2, H3 = w1.shape[1], w2.shape[1], w3.shape[1]
    assert wc.shape[0] == NUM_CROSS

    Dp = _round_up(D, LANE)
    Dwp = _round_up(Dw, LANE)
    H1p, H2p, H3p = (_round_up(h, LANE) for h in (H1, H2, H3))

    f32 = jnp.float32

    # ---- lane-padded, [in, out]-oriented weights; resident in VMEM across the grid ----
    # Fused first cross / first DNN layer: x0 @ [wc0 | w1] + [bc0 | b1].
    wf_p = jnp.concatenate([_pad2(wc[0].astype(f32), Dp, Dp),
                            _pad2(w1.astype(f32), Dp, H1p)], axis=1).astype(mxu_dtype)
    bf_p = jnp.concatenate([_pad2(bc[0].astype(f32), 1, Dp),
                            _pad2(b1.astype(f32), 1, H1p)], axis=1)            # [1, Dp+H1p]
    # Remaining cross layers.
    wc_p = jnp.stack([_pad2(wc[l].astype(f32), Dp, Dp)
                      for l in range(1, NUM_CROSS)]).astype(mxu_dtype)          # [L-1, Dp, Dp]
    bc_p = jnp.pad(bc[1:].astype(f32), ((0, 0), (0, 0), (0, Dp - D)))           # [L-1, 1, Dp]
    w2_p = _pad2(w2.astype(f32), H1p, H2p).astype(mxu_dtype)
    w3_p = _pad2(w3.astype(f32), H2p, H3p).astype(mxu_dtype)
    b2_p = _pad2(b2.astype(f32), 1, H2p)
    b3_p = _pad2(b3.astype(f32), 1, H3p)
    # Final fc split into cross / dnn halves as row vectors (VPU+XLU path, no N=1 matmul).
    fcw_c = _pad2(fcw[:D, :].T.astype(f32), 1, Dp)                              # [1, Dp]
    fcw_d = _pad2(fcw[D:, :].T.astype(f32), 1, H3p)                             # [1, H3p]
    bias = (fcb.astype(f32).reshape(()) + lrb.astype(f32).reshape(())).reshape(1)

    resident_arrays = (wf_p, bf_p, wc_p, bc_p, w2_p, b2_p, w3_p, b3_p, fcw_c, fcw_d, bias)
    weight_bytes = sum(int(a.size) * a.dtype.itemsize for a in resident_arrays)

    block_b, footprint = _choose_block_b(B, Dp, Dwp, weight_bytes, block_b_max)
    Bp = _round_up(B, block_b)
    n_tiles = Bp // block_b

    # ---- streamed activations: only materialize padding that is actually needed ----
    x = feature_map.astype(f32)
    lr_x = lr_feature_map.astype(f32)
    x = _pad2(x, Bp, Dp)        # no-op copies are skipped when already aligned
    lr_x = _pad2(lr_x, Bp, Dwp)

    vmem = pltpu.MemorySpace.VMEM
    smem = pltpu.MemorySpace.SMEM

    def resident():
        # Whole-array block in VMEM -> DMA'd once, stays resident across all grid steps.
        return pl.BlockSpec(memory_space=vmem)

    in_specs = [
        pl.BlockSpec((block_b, Dp), lambda i: (i, 0)),     # deep feature tile (streamed)
        pl.BlockSpec((block_b, Dwp), lambda i: (i, 0)),    # wide feature tile (streamed)
        resident(), resident(),   # wf, bf (fused layer)
        resident(), resident(),   # wc[1:], bc[1:]
        resident(), resident(),   # w2, b2
        resident(), resident(),   # w3, b3
        resident(), resident(),   # fcw_c, fcw_d
        pl.BlockSpec(memory_space=smem),                   # folded scalar bias (SMEM)
    ]
    out_spec = pl.BlockSpec((1, block_b), lambda i: (0, i))  # lane-dense output row

    cost = pl.CostEstimate(
        flops=2 * Bp * (Dp * (Dp + H1p) + (NUM_CROSS - 1) * Dp * Dp
                        + H1p * H2p + H2p * H3p) + 8 * Bp * Dp,
        transcendentals=Bp,
        bytes_accessed=4 * Bp * (Dp + Dwp + 1) + weight_bytes,
    )

    vmem_limit = int(min(64 * 1024 * 1024,
                         max(32 * 1024 * 1024, footprint + 16 * 1024 * 1024)))

    out = pl.pallas_call(
        functools.partial(dcn_kernel, mxu_dtype=mxu_dtype, dp=Dp),
        out_shape=jax.ShapeDtypeStruct((1, Bp), f32),
        grid=(n_tiles,),
        in_specs=in_specs,
        out_specs=out_spec,
        compiler_params=pltpu.CompilerParams(
            # Shards grid steps across the 2 TensorCores on v7x; harmless on v5e/v6e.
            dimension_semantics=("parallel",),
            vmem_limit_bytes=vmem_limit,
        ),
        cost_estimate=cost,
    )(x, lr_x, wf_p, bf_p, wc_p, bc_p, w2_p, b2_p, w3_p, b3_p, fcw_c, fcw_d, bias)

    return out.reshape(Bp, 1)[:B]


def dcn_ref(x, lr_x, wc, bc, w1, b1, w2, b2, w3, b3, fcw, fcb, lrb):
    """Pure-JAX reference mirroring the PyTorch forward."""
    x0, xi = x, x
    for l in range(NUM_CROSS):
        xi = xi + x0 * (xi @ wc[l] + bc[l, 0])
    h = jax.nn.relu(x0 @ w1 + b1[0])
    h = jax.nn.relu(h @ w2 + b2[0])
    h = jax.nn.relu(h @ w3 + b3[0])
    cat = jnp.concatenate([xi, h], axis=-1)
    logit = cat @ fcw + fcb
    lr_logit = jnp.sum(lr_x, axis=-1, keepdims=True) + lrb
    return jax.nn.sigmoid(logit + lr_logit)


if __name__ == "__main__":
    key = jax.random.PRNGKey(0)

    # Small, module-consistent shapes (embedding dims from module defaults,
    # feature counts and hidden units scaled down).
    B = 300                                            # exercises batch-tile padding
    deep_feature_count, deep_embedding_dim = 4, 10     # dnn_sparse
    D = deep_feature_count * deep_embedding_dim        # dnn_input_dim = 40
    wide_feature_count, wide_embedding_dim = 3, 10     # lr_sparse
    Dw = wide_feature_count * wide_embedding_dim       # 30
    H = 64                                             # parallel_dnn_hidden_units (scaled down)

    ks = jax.random.split(key, 16)

    def glorot(k, shape):
        lim = (6.0 / (shape[0] + shape[1])) ** 0.5
        return jax.random.uniform(k, shape, jnp.float32, -lim, lim)

    # Post-embedding dense feature maps (stand-ins for the sparse embedding outputs).
    feature_map = jax.random.normal(ks[0], (B, D), jnp.float32) * 0.1
    lr_feature_map = jax.random.normal(ks[1], (B, Dw), jnp.float32) * 0.1

    # CrossNetV2: NUM_CROSS Linear(D, D) layers (weights already [in, out]).
    wc = jnp.stack([glorot(ks[2 + i], (D, D)) for i in range(NUM_CROSS)])   # [L, D, D]
    bc = 0.01 * jax.random.normal(ks[5], (NUM_CROSS, 1, D), jnp.float32)    # [L, 1, D]

    # Parallel DNN: Linear(D,H)+ReLU, Linear(H,H)+ReLU, Linear(H,H)+ReLU.
    w1 = glorot(ks[6], (D, H)); b1 = 0.01 * jax.random.normal(ks[9], (1, H), jnp.float32)
    w2 = glorot(ks[7], (H, H)); b2 = 0.01 * jax.random.normal(ks[10], (1, H), jnp.float32)
    w3 = glorot(ks[8], (H, H)); b3 = 0.01 * jax.random.normal(ks[11], (1, H), jnp.float32)

    # Final fc: Linear(D + H, 1) and LRLayer bias.
    fcw = glorot(ks[12], (D + H, 1))
    fcb = 0.01 * jax.random.normal(ks[13], (1, 1), jnp.float32)
    lrb = 0.01 * jax.random.normal(ks[14], (1, 1), jnp.float32)

    ref = dcn_ref(feature_map, lr_feature_map, wc, bc,
                  w1, b1, w2, b2, w3, b3, fcw, fcb, lrb)

    # Exactness check on the f32 MXU path.
    out_f32 = dcn_forward(feature_map, lr_feature_map, wc, bc,
                          w1, b1, w2, b2, w3, b3, fcw, fcb, lrb,
                          mxu_dtype=jnp.float32)
    out_f32 = jax.block_until_ready(out_f32)
    assert out_f32.shape == (B, 1) and out_f32.dtype == jnp.float32
    assert bool(jnp.allclose(out_f32, ref, atol=1e-5, rtol=1e-5)), "f32 mismatch vs reference"

    # Default (perf) path: bf16 MXU operands, f32 accumulation -> slightly looser tol.
    out_bf16 = dcn_forward(feature_map, lr_feature_map, wc, bc,
                           w1, b1, w2, b2, w3, b3, fcw, fcb, lrb)
    out_bf16 = jax.block_until_ready(out_bf16)
    assert out_bf16.shape == (B, 1) and out_bf16.dtype == jnp.float32
    assert bool(jnp.allclose(out_bf16, ref, atol=5e-3, rtol=0.0)), "bf16 mismatch vs reference"

    print("KERNEL_OK")
</pallas_src>

<mosaic_0001>
module attributes {stable_mosaic.version = 11 : i64} {
  func.func @dcn_kernel(%arg0: i32, %arg1: memref<128x128xf32, #tpu.memory_space<vmem>>, %arg2: memref<128x128xf32, #tpu.memory_space<vmem>>, %arg3: memref<128x256xf32, #tpu.memory_space<vmem>>, %arg4: memref<1x256xf32, #tpu.memory_space<vmem>>, %arg5: memref<2x128x128xf32, #tpu.memory_space<vmem>>, %arg6: memref<2x1x128xf32, #tpu.memory_space<vmem>>, %arg7: memref<128x128xf32, #tpu.memory_space<vmem>>, %arg8: memref<1x128xf32, #tpu.memory_space<vmem>>, %arg9: memref<128x128xf32, #tpu.memory_space<vmem>>, %arg10: memref<1x128xf32, #tpu.memory_space<vmem>>, %arg11: memref<1x128xf32, #tpu.memory_space<vmem>>, %arg12: memref<1x128xf32, #tpu.memory_space<vmem>>, %arg13: memref<1xf32, #tpu.memory_space<smem>>, %arg14: memref<1x128xf32, #tpu.memory_space<vmem>>) attributes {dimension_semantics = [#tpu.dimension_semantics<parallel>], iteration_bounds = array<i64: 3>, scalar_prefetch = 0 : i64, scratch_operands = 0 : i64, tpu.core_type = #tpu.core_type<tc>, window_params = [{transform_indices = @transform_0, window_bounds = array<i64: 128, 128>}, {transform_indices = @transform_1, window_bounds = array<i64: 128, 128>}, {pipeline_mode = #tpu.pipeline_mode<synchronous>, transform_indices = @transform_2, window_bounds = array<i64: 128, 256>}, {pipeline_mode = #tpu.pipeline_mode<synchronous>, transform_indices = @transform_3, window_bounds = array<i64: 1, 256>}, {pipeline_mode = #tpu.pipeline_mode<synchronous>, transform_indices = @transform_4, window_bounds = array<i64: 2, 128, 128>}, {pipeline_mode = #tpu.pipeline_mode<synchronous>, transform_indices = @transform_5, window_bounds = array<i64: 2, 1, 128>}, {pipeline_mode = #tpu.pipeline_mode<synchronous>, transform_indices = @transform_6, window_bounds = array<i64: 128, 128>}, {pipeline_mode = #tpu.pipeline_mode<synchronous>, transform_indices = @transform_7, window_bounds = array<i64: 1, 128>}, {pipeline_mode = #tpu.pipeline_mode<synchronous>, transform_indices = @transform_8, window_bounds = array<i64: 128, 128>}, {pipeline_mode = #tpu.pipeline_mode<synchronous>, transform_indices = @transform_9, window_bounds = array<i64: 1, 128>}, {pipeline_mode = #tpu.pipeline_mode<synchronous>, transform_indices = @transform_10, window_bounds = array<i64: 1, 128>}, {pipeline_mode = #tpu.pipeline_mode<synchronous>, transform_indices = @transform_11, window_bounds = array<i64: 1, 128>}, {transform_indices = @transform_12, window_bounds = array<i64: 1>}, {transform_indices = @transform_13, window_bounds = array<i64: 1, 128>}]} {
    %c0 = arith.constant 0 : index
    %c0_0 = arith.constant 0 : index
    %0 = vector.load %arg1[%c0, %c0_0] : memref<128x128xf32, #tpu.memory_space<vmem>>, vector<128x128xf32>
    %c0_1 = arith.constant 0 : index
    %c0_2 = arith.constant 0 : index
    %1 = vector.load %arg3[%c0_1, %c0_2] : memref<128x256xf32, #tpu.memory_space<vmem>>, vector<128x256xf32>
    %cst = arith.constant dense<0.000000e+00> : vector<128x256xf32>
    %2 = tpu.matmul %0, %1, %cst {dimension_numbers = #tpu.dot_dimension_numbers<[1], [0], [0], [1], [0, 0, 1, 1], [], []>} : vector<128x128xf32>, vector<128x256xf32>, vector<128x256xf32> -> vector<128x256xf32>
    %c0_3 = arith.constant 0 : index
    %c0_4 = arith.constant 0 : index
    %3 = vector.load %arg4[%c0_3, %c0_4] : memref<1x256xf32, #tpu.memory_space<vmem>>, vector<1x256xf32>
    %4 = vector.broadcast %3 : vector<1x256xf32> to vector<128x256xf32>
    %5 = arith.addf %2, %4 : vector<128x256xf32>
    %6 = vector.extract_strided_slice %5 {offsets = [0, 0], sizes = [128, 128], strides = [1, 1]} : vector<128x256xf32> to vector<128x128xf32>
    %7 = vector.extract_strided_slice %5 {offsets = [0, 128], sizes = [128, 128], strides = [1, 1]} : vector<128x256xf32> to vector<128x128xf32>
    %cst_5 = arith.constant 0.000000e+00 : f32
    %8 = vector.broadcast %cst_5 : f32 to vector<128x128xf32>
    %9 = arith.maximumf %7, %8 : vector<128x128xf32>
    %10 = arith.mulf %0, %6 : vector<128x128xf32>
    %11 = arith.addf %0, %10 : vector<128x128xf32>
    %c0_6 = arith.constant 0 : index
    %c0_7 = arith.constant 0 : index
    %c0_8 = arith.constant 0 : index
    %12 = vector.load %arg5[%c0_6, %c0_7, %c0_8] : memref<2x128x128xf32, #tpu.memory_space<vmem>>, vector<1x128x128xf32>
    %13 = vector.shape_cast %12 : vector<1x128x128xf32> to vector<128x128xf32>
    %cst_9 = arith.constant dense<0.000000e+00> : vector<128x128xf32>
    %14 = tpu.matmul %11, %13, %cst_9 {dimension_numbers = #tpu.dot_dimension_numbers<[1], [0], [0], [1], [0, 0, 1, 1], [], []>} : vector<128x128xf32>, vector<128x128xf32>, vector<128x128xf32> -> vector<128x128xf32>
    %c0_10 = arith.constant 0 : index
    %c0_11 = arith.constant 0 : index
    %c0_12 = arith.constant 0 : index
    %15 = vector.load %arg6[%c0_10, %c0_11, %c0_12] : memref<2x1x128xf32, #tpu.memory_space<vmem>>, vector<1x1x128xf32>
    %16 = vector.shape_cast %15 : vector<1x1x128xf32> to vector<1x128xf32>
    %17 = vector.broadcast %16 : vector<1x128xf32> to vector<128x128xf32>
    %18 = arith.addf %14, %17 : vector<128x128xf32>
    %19 = arith.mulf %0, %18 : vector<128x128xf32>
    %20 = arith.addf %11, %19 : vector<128x128xf32>
    %c1 = arith.constant 1 : index
    %c0_13 = arith.constant 0 : index
    %c0_14 = arith.constant 0 : index
    %21 = vector.load %arg5[%c1, %c0_13, %c0_14] : memref<2x128x128xf32, #tpu.memory_space<vmem>>, vector<1x128x128xf32>
    %22 = vector.shape_cast %21 : vector<1x128x128xf32> to vector<128x128xf32>
    %cst_15 = arith.constant dense<0.000000e+00> : vector<128x128xf32>
    %23 = tpu.matmul %20, %22, %cst_15 {dimension_numbers = #tpu.dot_dimension_numbers<[1], [0], [0], [1], [0, 0, 1, 1], [], []>} : vector<128x128xf32>, vector<128x128xf32>, vector<128x128xf32> -> vector<128x128xf32>
    %c1_16 = arith.constant 1 : index
    %c0_17 = arith.constant 0 : index
    %c0_18 = arith.constant 0 : index
    %24 = vector.load %arg6[%c1_16, %c0_17, %c0_18] : memref<2x1x128xf32, #tpu.memory_space<vmem>>, vector<1x1x128xf32>
    %25 = vector.shape_cast %24 : vector<1x1x128xf32> to vector<1x128xf32>
    %26 = vector.broadcast %25 : vector<1x128xf32> to vector<128x128xf32>
    %27 = arith.addf %23, %26 : vector<128x128xf32>
    %28 = arith.mulf %0, %27 : vector<128x128xf32>
    %29 = arith.addf %20, %28 : vector<128x128xf32>
    %c0_19 = arith.constant 0 : index
    %c0_20 = arith.constant 0 : index
    %30 = vector.load %arg7[%c0_19, %c0_20] : memref<128x128xf32, #tpu.memory_space<vmem>>, vector<128x128xf32>
    %cst_21 = arith.constant dense<0.000000e+00> : vector<128x128xf32>
    %31 = tpu.matmul %9, %30, %cst_21 {dimension_numbers = #tpu.dot_dimension_numbers<[1], [0], [0], [1], [0, 0, 1, 1], [], []>} : vector<128x128xf32>, vector<128x128xf32>, vector<128x128xf32> -> vector<128x128xf32>
    %c0_22 = arith.constant 0 : index
    %c0_23 = arith.constant 0 : index
    %32 = vector.load %arg8[%c0_22, %c0_23] : memref<1x128xf32, #tpu.memory_space<vmem>>, vector<1x128xf32>
    %33 = vector.broadcast %32 : vector<1x128xf32> to vector<128x128xf32>
    %34 = arith.addf %31, %33 : vector<128x128xf32>
    %cst_24 = arith.constant 0.000000e+00 : f32
    %35 = vector.broadcast %cst_24 : f32 to vector<128x128xf32>
    %36 = arith.maximumf %34, %35 : vector<128x128xf32>
    %c0_25 = arith.constant 0 : index
    %c0_26 = arith.constant 0 : index
    %37 = vector.load %arg9[%c0_25, %c0_26] : memref<128x128xf32, #tpu.memory_space<vmem>>, vector<128x128xf32>
    %cst_27 = arith.constant dense<0.000000e+00> : vector<128x128xf32>
    %38 = tpu.matmul %36, %37, %cst_27 {dimension_numbers = #tpu.dot_dimension_numbers<[1], [0], [0], [1], [0, 0, 1, 1], [], []>} : vector<128x128xf32>, vector<128x128xf32>, vector<128x128xf32> -> vector<128x128xf32>
    %c0_28 = arith.constant 0 : index
    %c0_29 = arith.constant 0 : index
    %39 = vector.load %arg10[%c0_28, %c0_29] : memref<1x128xf32, #tpu.memory_space<vmem>>, vector<1x128xf32>
    %40 = vector.broadcast %39 : vector<1x128xf32> to vector<128x128xf32>
    %41 = arith.addf %38, %40 : vector<128x128xf32>
    %cst_30 = arith.constant 0.000000e+00 : f32
    %42 = vector.broadcast %cst_30 : f32 to vector<128x128xf32>
    %43 = arith.maximumf %41, %42 : vector<128x128xf32>
    %c0_31 = arith.constant 0 : index
    %c0_32 = arith.constant 0 : index
    %44 = vector.load %arg11[%c0_31, %c0_32] : memref<1x128xf32, #tpu.memory_space<vmem>>, vector<1x128xf32>
    %45 = vector.broadcast %44 : vector<1x128xf32> to vector<128x128xf32>
    %46 = arith.mulf %29, %45 : vector<128x128xf32>
    %cst_33 = arith.constant dense<0.000000e+00> : vector<128xf32>
    %47 = vector.multi_reduction <add>, %46, %cst_33 [1] : vector<128x128xf32> to vector<128xf32>
    %48 = vector.shape_cast %47 : vector<128xf32> to vector<128x1xf32>
    %c0_34 = arith.constant 0 : index
    %c0_35 = arith.constant 0 : index
    %49 = vector.load %arg12[%c0_34, %c0_35] : memref<1x128xf32, #tpu.memory_space<vmem>>, vector<1x128xf32>
    %50 = vector.broadcast %49 : vector<1x128xf32> to vector<128x128xf32>
    %51 = arith.mulf %43, %50 : vector<128x128xf32>
    %cst_36 = arith.constant dense<0.000000e+00> : vector<128xf32>
    %52 = vector.multi_reduction <add>, %51, %cst_36 [1] : vector<128x128xf32> to vector<128xf32>
    %53 = vector.shape_cast %52 : vector<128xf32> to vector<128x1xf32>
    %54 = arith.addf %48, %53 : vector<128x1xf32>
    %c0_37 = arith.constant 0 : index
    %c0_38 = arith.constant 0 : index
    %55 = vector.load %arg2[%c0_37, %c0_38] : memref<128x128xf32, #tpu.memory_space<vmem>>, vector<128x128xf32>
    %cst_39 = arith.constant dense<0.000000e+00> : vector<128xf32>
    %56 = vector.multi_reduction <add>, %55, %cst_39 [1] : vector<128x128xf32> to vector<128xf32>
    %57 = vector.shape_cast %56 : vector<128xf32> to vector<128x1xf32>
    %58 = arith.addf %54, %57 : vector<128x1xf32>
    %c0_40 = arith.constant 0 : index
    %59 = memref.load %arg13[%c0_40] : memref<1xf32, #tpu.memory_space<smem>>
    %60 = vector.broadcast %59 : f32 to vector<128x1xf32>
    %61 = arith.addf %58, %60 : vector<128x1xf32>
    %62 = arith.negf %61 : vector<128x1xf32>
    %63 = math.exp %62 : vector<128x1xf32>
    %cst_41 = arith.constant 1.000000e+00 : f32
    %64 = vector.broadcast %cst_41 : f32 to vector<128x1xf32>
    %65 = arith.addf %64, %63 : vector<128x1xf32>
    %66 = arith.divf %64, %65 : vector<128x1xf32>
    %67 = tpu.transpose %66, [1, 0] : vector<128x1xf32> -> vector<1x128xf32>
    %c0_42 = arith.constant 0 : index
    %c0_43 = arith.constant 0 : index
    %68 = vector.load %arg14[%c0_42, %c0_43] : memref<1x128xf32, #tpu.memory_space<vmem>>, vector<1x128xf32>
    tpu.vector_store %arg14[%c0_42, %c0_43], %67 {strides = array<i32>} : memref<1x128xf32, #tpu.memory_space<vmem>>, vector<1x128xf32>,
    return
  }
  func.func @transform_0(%arg0: i32) -> (i32, i32) {
    %c0_i32 = arith.constant 0 : i32
    %c0_i32_0 = arith.constant 0 : i32
    return %arg0, %c0_i32 : i32, i32
  }
  func.func @transform_1(%arg0: i32) -> (i32, i32) {
    %c0_i32 = arith.constant 0 : i32
    %c0_i32_0 = arith.constant 0 : i32
    return %arg0, %c0_i32 : i32, i32
  }
  func.func @transform_2(%arg0: i32) -> (i32, i32) {
    %c0_i32 = arith.constant 0 : i32
    %c0_i32_0 = arith.constant 0 : i32
    %c0_i32_1 = arith.constant 0 : i32
    return %c0_i32, %c0_i32_0 : i32, i32
  }
  func.func @transform_3(%arg0: i32) -> (i32, i32) {
    %c0_i32 = arith.constant 0 : i32
    %c0_i32_0 = arith.constant 0 : i32
    %c0_i32_1 = arith.constant 0 : i32
    return %c0_i32, %c0_i32_0 : i32, i32
  }
  func.func @transform_4(%arg0: i32) -> (i32, i32, i32) {
    %c0_i32 = arith.constant 0 : i32
    %c0_i32_0 = arith.constant 0 : i32
    %c0_i32_1 = arith.constant 0 : i32
    %c0_i32_2 = arith.constant 0 : i32
    return %c0_i32, %c0_i32_0, %c0_i32_1 : i32, i32, i32
  }
  func.func @transform_5(%arg0: i32) -> (i32, i32, i32) {
    %c0_i32 = arith.constant 0 : i32
    %c0_i32_0 = arith.constant 0 : i32
    %c0_i32_1 = arith.constant 0 : i32
    %c0_i32_2 = arith.constant 0 : i32
    return %c0_i32, %c0_i32_0, %c0_i32_1 : i32, i32, i32
  }
  func.func @transform_6(%arg0: i32) -> (i32, i32) {
    %c0_i32 = arith.constant 0 : i32
    %c0_i32_0 = arith.constant 0 : i32
    %c0_i32_1 = arith.constant 0 : i32
    return %c0_i32, %c0_i32_0 : i32, i32
  }
  func.func @transform_7(%arg0: i32) -> (i32, i32) {
    %c0_i32 = arith.constant 0 : i32
    %c0_i32_0 = arith.constant 0 : i32
    %c0_i32_1 = arith.constant 0 : i32
    return %c0_i32, %c0_i32_0 : i32, i32
  }
  func.func @transform_8(%arg0: i32) -> (i32, i32) {
    %c0_i32 = arith.constant 0 : i32
    %c0_i32_0 = arith.constant 0 : i32
    %c0_i32_1 = arith.constant 0 : i32
    return %c0_i32, %c0_i32_0 : i32, i32
  }
  func.func @transform_9(%arg0: i32) -> (i32, i32) {
    %c0_i32 = arith.constant 0 : i32
    %c0_i32_0 = arith.constant 0 : i32
    %c0_i32_1 = arith.constant 0 : i32
    return %c0_i32, %c0_i32_0 : i32, i32
  }
  func.func @transform_10(%arg0: i32) -> (i32, i32) {
    %c0_i32 = arith.constant 0 : i32
    %c0_i32_0 = arith.constant 0 : i32
    %c0_i32_1 = arith.constant 0 : i32
    return %c0_i32, %c0_i32_0 : i32, i32
  }
  func.func @transform_11(%arg0: i32) -> (i32, i32) {
    %c0_i32 = arith.constant 0 : i32
    %c0_i32_0 = arith.constant 0 : i32
    %c0_i32_1 = arith.constant 0 : i32
    return %c0_i32, %c0_i32_0 : i32, i32
  }
  func.func @transform_12(%arg0: i32) -> i32 {
    %c0_i32 = arith.constant 0 : i32
    %c0_i32_0 = arith.constant 0 : i32
    return %c0_i32 : i32
  }
  func.func @transform_13(%arg0: i32) -> (i32, i32) {
    %c0_i32 = arith.constant 0 : i32
    %c0_i32_0 = arith.constant 0 : i32
    return %c0_i32, %arg0 : i32, i32
  }
}

</mosaic_0001>

<llo_original>
// kernel: tpu_custom_call.1
$region0: #{tpu_custom_call.1}
  #allocation0 [shape = 'u32[]', space=smem, size = 0x4, offset = 0x4, fixed_abs, tag = 'smem constant byte address 0x4 - core index']
  #allocation1 [shape = 'u32[144,128]{1,0:T(1,128)}', space=vmem, size = 0x12000, scoped, tag = 'internal scratch']
  #allocation2 [shape = 'f32[1]{0:T(128)S(6)}', space=smem, size = 0x200, scoped, tag = 'scoped memory for tpu_custom_call.1']
  %s0 = inlined_call_operand.hbm [shape: f32[384,128], index: 0, kind: input, shape index: {}]
  %s1 = inlined_call_operand.hbm [shape: f32[384,128], index: 1, kind: input, shape index: {}]
  %s2 = inlined_call_operand.hbm [shape: f32[128,256], index: 2, kind: input, shape index: {}]
  %s3 = inlined_call_operand.vmem [shape: f32[1,256], index: 3, kind: input, shape index: {}]
  %s4 = inlined_call_operand.hbm [shape: f32[2,128,128], index: 4, kind: input, shape index: {}]
  %s5 = inlined_call_operand.vmem [shape: f32[2,1,128], index: 5, kind: input, shape index: {}]
  %s6 = inlined_call_operand.hbm [shape: f32[128,128], index: 6, kind: input, shape index: {}]
  %s7 = inlined_call_operand.vmem [shape: f32[1,128], index: 7, kind: input, shape index: {}]
  %s8 = inlined_call_operand.hbm [shape: f32[128,128], index: 8, kind: input, shape index: {}]
  %s9 = inlined_call_operand.vmem [shape: f32[1,128], index: 9, kind: input, shape index: {}]
  %s10 = inlined_call_operand.vmem [shape: f32[1,128], index: 10, kind: input, shape index: {}]
  %s11 = inlined_call_operand.vmem [shape: f32[1,128], index: 11, kind: input, shape index: {}]
  %s12 = inlined_call_operand.<no memory space> [shape: f32[1], index: 12, kind: input, shape index: {}]
  %s13 = inlined_call_operand.hbm [shape: f32[1,384], index: 13, kind: output, shape index: {}]
  %s14 = sld [smem:[#allocation0]]
  $region109: #{tpu_custom_call.1} parent=0
    _
  %s16 = ssub.s32 1, %s14
  %s17 = scalar_select 0, %s16, %s14
  %18 = sst [smem:[#allocation2]] %s12
  $region1: #{tpu_custom_call.1} parent=0
    #allocation3 [shape = 'u8[131072]{0}', space=vmem, size = 0x20000, scoped, tag = 'input window, operand 0']
    #allocation4 [shape = 's32[2]{0}', space=sflag, size = 0x8, scoped, tag = 'scoped memory for tpu_custom_call.1']
    #allocation5 [shape = 's32[2]{0}', space=sflag, size = 0x8, scoped, tag = 'scoped memory for tpu_custom_call.1']
    #allocation6 [shape = 'u8[131072]{0}', space=vmem, size = 0x20000, scoped, tag = 'input window, operand 1']
    #allocation7 [shape = 's32[2]{0}', space=sflag, size = 0x8, scoped, tag = 'scoped memory for tpu_custom_call.1']
    #allocation8 [shape = 'u8[131072]{0}', space=vmem, size = 0x20000, scoped, tag = 'input window, operand 2, single buffered']
    #allocation9 [shape = 'u8[131072]{0}', space=vmem, size = 0x20000, scoped, tag = 'input window, operand 4, single buffered']
    #allocation10 [shape = 's32[1]{0}', space=sflag, size = 0x4, scoped, tag = 'scoped memory for tpu_custom_call.1']
    #allocation11 [shape = 'u8[65536]{0}', space=vmem, size = 0x10000, scoped, tag = 'input window, operand 6, single buffered']
    #allocation12 [shape = 'u8[65536]{0}', space=vmem, size = 0x10000, scoped, tag = 'input window, operand 8, single buffered']
    #allocation13 [shape = 's32[1]{0}', space=sflag, size = 0x4, scoped, tag = 'scoped memory for tpu_custom_call.1']
    #allocation14 [shape = 'u8[1024]{0}', space=vmem, size = 0x400, scoped, tag = 'output window, operand 0']
    %19 = vsyncpa [#allocation4], 0
    %s20 = scalar_lea.sflag [#allocation4], 1
    %21 = vsyncpa %s20, 0
    %22 = vsyncpa [#allocation7], 0
    %s23 = scalar_lea.sflag [#allocation7], 1
    %24 = vsyncpa %s23, 0
    %25 = vsyncpa [#allocation10], 0
    %26 = vsyncpa [#allocation13], 0
    %27 = vsyncpa [#allocation5], 0
    %s28 = scalar_lea.sflag [#allocation5], 1
    %29 = vsyncpa %s28, 0
    loop: start=0, step=1, limit=5
    $region2: #{tpu_custom_call.1} parent=1 // loop_pre_header
      _
    $region3: #{tpu_custom_call.1} parent=1 // loop_header
      %s31 = sphi 0, %s35
      %p32 = scmp.ge.s32.totalorder %s31, 5
      %s41 = sphi 0, %s43
      %s44 = sphi 0, %s41
      %s45 = sphi 0, %s44
      %s61 = sphi 0, %s45
      %s67 = sphi 0, %s69
      %s70 = sphi 0, %s67
      %s71 = sphi 0, %s70
      %s87 = sphi 0, %s71
      %s91 = sphi 0, %s91
      %s93 = sphi 0, %s91
      %s94 = sphi 0, %s93
      %s108 = sphi 0, %s94
      %s112 = sphi 0, %s112
      %s114 = sphi 0, %s112
      %s115 = sphi 0, %s114
      %s129 = sphi 0, %s115
      %s133 = sphi 0, %s133
      %s135 = sphi 0, %s133
      %s136 = sphi 0, %s135
      %s150 = sphi 0, %s136
      %s154 = sphi 0, %s154
      %s156 = sphi 0, %s154
      %s157 = sphi 0, %s156
      %s171 = sphi 0, %s157
      %s175 = sphi 0, %s175
      %s177 = sphi 0, %s175
      %s178 = sphi 0, %s177
      %s192 = sphi 0, %s178
      %s196 = sphi 0, %s196
      %s198 = sphi 0, %s196
      %s199 = sphi 0, %s198
      %s213 = sphi 0, %s199
      %s217 = sphi 0, %s217
      %s219 = sphi 0, %s217
      %s220 = sphi 0, %s219
      %s234 = sphi 0, %s220
      %s238 = sphi 0, %s238
      %s240 = sphi 0, %s238
      %s241 = sphi 0, %s240
      %s255 = sphi 0, %s241
      %s259 = sphi 0, %s259
      %s261 = sphi 0, %s259
      %s262 = sphi 0, %s261
      %s276 = sphi 0, %s262
      %s280 = sphi 0, %s280
      %s282 = sphi 0, %s280
      %s283 = sphi 0, %s282
      %s297 = sphi 0, %s283
      %s301 = sphi 0, %s301
      %s303 = sphi 0, %s301
      %s304 = sphi 0, %s303
      %s318 = sphi 0, %s304
      %s324 = sphi 0, %s326
      %s327 = sphi 0, %s324
      %s328 = sphi 0, %s327
      %s344 = sphi 0, %s328
    $region4: #{tpu_custom_call.1} parent=1 // loop_header_branch
      %34 = sbr.rel (%p32) target = $region8
    $region5: #{tpu_custom_call.1} parent=1 // loop_body
      %s36 = ssub.s32 %s31, 1
      %s37 = ssub.s32 %s31, 2
      %s38 = sadd.s32 %s31, 1
      %s39 = ssub.s32 %s31, %s38
      %p40 = scmp.eq.s32.totalorder %s39, 0
      %s42 = sadd.s32 %s41, 1
      %s43 = scalar_select %p40, %s41, %s42
      %p46 = pneg %p40
      %p47 = scmp.eq.s32.totalorder %s31, 2
      %p48 = por %p46, %p47
      %p49 = scmp.ne.s32.totalorder %s41, %s44
      %p50 = scmp.eq.s32.totalorder %s31, 0
      %p51 = por %p49, %p50
      %p52 = scmp.ne.s32.totalorder %s41, %s44
      %p53 = scmp.eq.s32.totalorder %s36, 2
      %p54 = por %p52, %p53
      %p55 = scmp.ne.s32.totalorder %s44, %s45
      %p56 = scmp.eq.s32.totalorder %s36, 0
      %p57 = por %p55, %p56
      %p58 = scmp.ne.s32.totalorder %s44, %s45
      %p59 = scmp.eq.s32.totalorder %s37, 2
      %p60 = por %p58, %p59
      %p62 = scmp.ne.s32.totalorder %s45, %s61
      %p63 = scmp.eq.s32.totalorder %s37, 0
      %p64 = por %p62, %p63
      %s65 = ssub.s32 %s31, %s38
      %p66 = scmp.eq.s32.totalorder %s65, 0
      %s68 = sadd.s32 %s67, 1
      %s69 = scalar_select %p66, %s67, %s68
      %p72 = pneg %p66
      %p73 = scmp.eq.s32.totalorder %s31, 2
      %p74 = por %p72, %p73
      %p75 = scmp.ne.s32.totalorder %s67, %s70
      %p76 = scmp.eq.s32.totalorder %s31, 0
      %p77 = por %p75, %p76
      %p78 = scmp.ne.s32.totalorder %s67, %s70
      %p79 = scmp.eq.s32.totalorder %s36, 2
      %p80 = por %p78, %p79
      %p81 = scmp.ne.s32.totalorder %s70, %s71
      %p82 = scmp.eq.s32.totalorder %s36, 0
      %p83 = por %p81, %p82
      %p84 = scmp.ne.s32.totalorder %s70, %s71
      %p85 = scmp.eq.s32.totalorder %s37, 2
      %p86 = por %p84, %p85
      %p88 = scmp.ne.s32.totalorder %s71, %s87
      %p89 = scmp.eq.s32.totalorder %s37, 0
      %p90 = por %p88, %p89
      %s92 = sadd.s32 %s91, 1
      %p95 = scmp.eq.s32.totalorder %s31, 2
      %p96 = scmp.ne.s32.totalorder %s91, %s93
      %p97 = scmp.eq.s32.totalorder %s31, 0
      %p98 = por %p96, %p97
      %p99 = scmp.ne.s32.totalorder %s91, %s93
      %p100 = scmp.eq.s32.totalorder %s36, 2
      %p101 = por %p99, %p100
      %p102 = scmp.ne.s32.totalorder %s93, %s94
      %p103 = scmp.eq.s32.totalorder %s36, 0
      %p104 = por %p102, %p103
      %p105 = scmp.ne.s32.totalorder %s93, %s94
      %p106 = scmp.eq.s32.totalorder %s37, 2
      %p107 = por %p105, %p106
      %p109 = scmp.ne.s32.totalorder %s94, %s108
      %p110 = scmp.eq.s32.totalorder %s37, 0
      %p111 = por %p109, %p110
      %s113 = sadd.s32 %s112, 1
      %p116 = scmp.eq.s32.totalorder %s31, 2
      %p117 = scmp.ne.s32.totalorder %s112, %s114
      %p118 = scmp.eq.s32.totalorder %s31, 0
      %p119 = por %p117, %p118
      %p120 = scmp.ne.s32.totalorder %s112, %s114
      %p121 = scmp.eq.s32.totalorder %s36, 2
      %p122 = por %p120, %p121
      %p123 = scmp.ne.s32.totalorder %s114, %s115
      %p124 = scmp.eq.s32.totalorder %s36, 0
      %p125 = por %p123, %p124
      %p126 = scmp.ne.s32.totalorder %s114, %s115
      %p127 = scmp.eq.s32.totalorder %s37, 2
      %p128 = por %p126, %p127
      %p130 = scmp.ne.s32.totalorder %s115, %s129
      %p131 = scmp.eq.s32.totalorder %s37, 0
      %p132 = por %p130, %p131
      %s134 = sadd.s32 %s133, 1
      %p137 = scmp.eq.s32.totalorder %s31, 2
      %p138 = scmp.ne.s32.totalorder %s133, %s135
      %p139 = scmp.eq.s32.totalorder %s31, 0
      %p140 = por %p138, %p139
      %p141 = scmp.ne.s32.totalorder %s133, %s135
      %p142 = scmp.eq.s32.totalorder %s36, 2
      %p143 = por %p141, %p142
      %p144 = scmp.ne.s32.totalorder %s135, %s136
      %p145 = scmp.eq.s32.totalorder %s36, 0
      %p146 = por %p144, %p145
      %p147 = scmp.ne.s32.totalorder %s135, %s136
      %p148 = scmp.eq.s32.totalorder %s37, 2
      %p149 = por %p147, %p148
      %p151 = scmp.ne.s32.totalorder %s136, %s150
      %p152 = scmp.eq.s32.totalorder %s37, 0
      %p153 = por %p151, %p152
      %s155 = sadd.s32 %s154, 1
      %p158 = scmp.eq.s32.totalorder %s31, 2
      %p159 = scmp.ne.s32.totalorder %s154, %s156
      %p160 = scmp.eq.s32.totalorder %s31, 0
      %p161 = por %p159, %p160
      %p162 = scmp.ne.s32.totalorder %s154, %s156
      %p163 = scmp.eq.s32.totalorder %s36, 2
      %p164 = por %p162, %p163
      %p165 = scmp.ne.s32.totalorder %s156, %s157
      %p166 = scmp.eq.s32.totalorder %s36, 0
      %p167 = por %p165, %p166
      %p168 = scmp.ne.s32.totalorder %s156, %s157
      %p169 = scmp.eq.s32.totalorder %s37, 2
      %p170 = por %p168, %p169
      %p172 = scmp.ne.s32.totalorder %s157, %s171
      %p173 = scmp.eq.s32.totalorder %s37, 0
      %p174 = por %p172, %p173
      %s176 = sadd.s32 %s175, 1
      %p179 = scmp.eq.s32.totalorder %s31, 2
      %p180 = scmp.ne.s32.totalorder %s175, %s177
      %p181 = scmp.eq.s32.totalorder %s31, 0
      %p182 = por %p180, %p181
      %p183 = scmp.ne.s32.totalorder %s175, %s177
      %p184 = scmp.eq.s32.totalorder %s36, 2
      %p185 = por %p183, %p184
      %p186 = scmp.ne.s32.totalorder %s177, %s178
      %p187 = scmp.eq.s32.totalorder %s36, 0
      %p188 = por %p186, %p187
      %p189 = scmp.ne.s32.totalorder %s177, %s178
      %p190 = scmp.eq.s32.totalorder %s37, 2
      %p191 = por %p189, %p190
      %p193 = scmp.ne.s32.totalorder %s178, %s192
      %p194 = scmp.eq.s32.totalorder %s37, 0
      %p195 = por %p193, %p194
      %s197 = sadd.s32 %s196, 1
      %p200 = scmp.eq.s32.totalorder %s31, 2
      %p201 = scmp.ne.s32.totalorder %s196, %s198
      %p202 = scmp.eq.s32.totalorder %s31, 0
      %p203 = por %p201, %p202
      %p204 = scmp.ne.s32.totalorder %s196, %s198
      %p205 = scmp.eq.s32.totalorder %s36, 2
      %p206 = por %p204, %p205
      %p207 = scmp.ne.s32.totalorder %s198, %s199
      %p208 = scmp.eq.s32.totalorder %s36, 0
      %p209 = por %p207, %p208
      %p210 = scmp.ne.s32.totalorder %s198, %s199
      %p211 = scmp.eq.s32.totalorder %s37, 2
      %p212 = por %p210, %p211
      %p214 = scmp.ne.s32.totalorder %s199, %s213
      %p215 = scmp.eq.s32.totalorder %s37, 0
      %p216 = por %p214, %p215
      %s218 = sadd.s32 %s217, 1
      %p221 = scmp.eq.s32.totalorder %s31, 2
      %p222 = scmp.ne.s32.totalorder %s217, %s219
      %p223 = scmp.eq.s32.totalorder %s31, 0
      %p224 = por %p222, %p223
      %p225 = scmp.ne.s32.totalorder %s217, %s219
      %p226 = scmp.eq.s32.totalorder %s36, 2
      %p227 = por %p225, %p226
      %p228 = scmp.ne.s32.totalorder %s219, %s220
      %p229 = scmp.eq.s32.totalorder %s36, 0
      %p230 = por %p228, %p229
      %p231 = scmp.ne.s32.totalorder %s219, %s220
      %p232 = scmp.eq.s32.totalorder %s37, 2
      %p233 = por %p231, %p232
      %p235 = scmp.ne.s32.totalorder %s220, %s234
      %p236 = scmp.eq.s32.totalorder %s37, 0
      %p237 = por %p235, %p236
      %s239 = sadd.s32 %s238, 1
      %p242 = scmp.eq.s32.totalorder %s31, 2
      %p243 = scmp.ne.s32.totalorder %s238, %s240
      %p244 = scmp.eq.s32.totalorder %s31, 0
      %p245 = por %p243, %p244
      %p246 = scmp.ne.s32.totalorder %s238, %s240
      %p247 = scmp.eq.s32.totalorder %s36, 2
      %p248 = por %p246, %p247
      %p249 = scmp.ne.s32.totalorder %s240, %s241
      %p250 = scmp.eq.s32.totalorder %s36, 0
      %p251 = por %p249, %p250
      %p252 = scmp.ne.s32.totalorder %s240, %s241
      %p253 = scmp.eq.s32.totalorder %s37, 2
      %p254 = por %p252, %p253
      %p256 = scmp.ne.s32.totalorder %s241, %s255
      %p257 = scmp.eq.s32.totalorder %s37, 0
      %p258 = por %p256, %p257
      %s260 = sadd.s32 %s259, 1
      %p263 = scmp.eq.s32.totalorder %s31, 2
      %p264 = scmp.ne.s32.totalorder %s259, %s261
      %p265 = scmp.eq.s32.totalorder %s31, 0
      %p266 = por %p264, %p265
      %p267 = scmp.ne.s32.totalorder %s259, %s261
      %p268 = scmp.eq.s32.totalorder %s36, 2
      %p269 = por %p267, %p268
      %p270 = scmp.ne.s32.totalorder %s261, %s262
      %p271 = scmp.eq.s32.totalorder %s36, 0
      %p272 = por %p270, %p271
      %p273 = scmp.ne.s32.totalorder %s261, %s262
      %p274 = scmp.eq.s32.totalorder %s37, 2
      %p275 = por %p273, %p274
      %p277 = scmp.ne.s32.totalorder %s262, %s276
      %p278 = scmp.eq.s32.totalorder %s37, 0
      %p279 = por %p277, %p278
      %s281 = sadd.s32 %s280, 1
      %p284 = scmp.eq.s32.totalorder %s31, 2
      %p285 = scmp.ne.s32.totalorder %s280, %s282
      %p286 = scmp.eq.s32.totalorder %s31, 0
      %p287 = por %p285, %p286
      %p288 = scmp.ne.s32.totalorder %s280, %s282
      %p289 = scmp.eq.s32.totalorder %s36, 2
      %p290 = por %p288, %p289
      %p291 = scmp.ne.s32.totalorder %s282, %s283
      %p292 = scmp.eq.s32.totalorder %s36, 0
      %p293 = por %p291, %p292
      %p294 = scmp.ne.s32.totalorder %s282, %s283
      %p295 = scmp.eq.s32.totalorder %s37, 2
      %p296 = por %p294, %p295
      %p298 = scmp.ne.s32.totalorder %s283, %s297
      %p299 = scmp.eq.s32.totalorder %s37, 0
      %p300 = por %p298, %p299
      %s302 = sadd.s32 %s301, 1
      %p305 = scmp.eq.s32.totalorder %s31, 2
      %p306 = scmp.ne.s32.totalorder %s301, %s303
      %p307 = scmp.eq.s32.totalorder %s31, 0
      %p308 = por %p306, %p307
      %p309 = scmp.ne.s32.totalorder %s301, %s303
      %p310 = scmp.eq.s32.totalorder %s36, 2
      %p311 = por %p309, %p310
      %p312 = scmp.ne.s32.totalorder %s303, %s304
      %p313 = scmp.eq.s32.totalorder %s36, 0
      %p314 = por %p312, %p313
      %p315 = scmp.ne.s32.totalorder %s303, %s304
      %p316 = scmp.eq.s32.totalorder %s37, 2
      %p317 = por %p315, %p316
      %p319 = scmp.ne.s32.totalorder %s304, %s318
      %p320 = scmp.eq.s32.totalorder %s37, 0
      %p321 = por %p319, %p320
      %s322 = ssub.s32 %s31, %s38
      %p323 = scmp.eq.s32.totalorder %s322, 0
      %s325 = sadd.s32 %s324, 1
      %s326 = scalar_select %p323, %s324, %s325
      %p329 = pneg %p323
      %p330 = scmp.eq.s32.totalorder %s31, 2
      %p331 = por %p329, %p330
      %p332 = scmp.ne.s32.totalorder %s324, %s327
      %p333 = scmp.eq.s32.totalorder %s31, 0
      %p334 = por %p332, %p333
      %p335 = scmp.ne.s32.totalorder %s324, %s327
      %p336 = scmp.eq.s32.totalorder %s36, 2
      %p337 = por %p335, %p336
      %p338 = scmp.ne.s32.totalorder %s327, %s328
      %p339 = scmp.eq.s32.totalorder %s36, 0
      %p340 = por %p338, %p339
      %p341 = scmp.ne.s32.totalorder %s327, %s328
      %p342 = scmp.eq.s32.totalorder %s37, 2
      %p343 = por %p341, %p342
      %p345 = scmp.ne.s32.totalorder %s328, %s344
      %p346 = scmp.eq.s32.totalorder %s37, 0
      %p347 = por %p345, %p346
      %p348 = scmp.le.s32.totalorder 1, %s31
      %p349 = scmp.lt.s32.totalorder %s31, 4
      %p350 = pnand %p348, %p349
      %p351 = pneg %p350
      // Predicated region
      $region9: #{tpu_custom_call.1} parent=5 // pred_check
        _
      $region10: #{tpu_custom_call.1} parent=5 // pred_check_branch
        %353 = sbr.rel (%p350) target = $region12
      $region11: #{tpu_custom_call.1} parent=5 // pred_region
        %s354 = ssub.s32 %s31, 1
        // Predicated region
        $region13: #{tpu_custom_call.1} parent=11 // pred_check
          %p355 = pneg %p104
        $region14: #{tpu_custom_call.1} parent=11 // pred_check_branch
          %357 = sbr.rel (%p355) target = $region16
        $region15: #{tpu_custom_call.1} parent=11 // pred_region
          %s359 = ssub.s32 4096, 4096
          %360 = vsyncadd [#allocation7], %s359
          %s361 = sshll.u32 [#allocation8], 4
          %s362 = int_to_ptr.vmem [resolvable:$true] %s361
          %367 = dma.hbm_to_vmem [thread:$0]  %s2, 4096, %s362, [#allocation7], 256, 256, 16
        $region16: #{tpu_custom_call.1} parent=11 // pred_fallthru
          _
        // Predicated region
        $region17: #{tpu_custom_call.1} parent=11 // pred_check
          %p368 = pneg %p125
        $region18: #{tpu_custom_call.1} parent=11 // pred_check_branch
          %370 = sbr.rel (%p368) target = $region20
        $region19: #{tpu_custom_call.1} parent=11 // pred_region
          _
        $region20: #{tpu_custom_call.1} parent=11 // pred_fallthru
          _
        // Predicated region
        $region21: #{tpu_custom_call.1} parent=11 // pred_check
          %p371 = pneg %p146
        $region22: #{tpu_custom_call.1} parent=11 // pred_check_branch
          %373 = sbr.rel (%p371) target = $region24
        $region23: #{tpu_custom_call.1} parent=11 // pred_region
          %s375 = ssub.s32 4096, 4096
          %376 = vsyncadd [#allocation10], %s375
          %s377 = sshll.u32 [#allocation9], 4
          %s378 = int_to_ptr.vmem [resolvable:$true] %s377
          %383 = dma.hbm_to_vmem [thread:$0]  %s4, 4096, %s378, [#allocation10], 128, 128, 8
        $region24: #{tpu_custom_call.1} parent=11 // pred_fallthru
          _
        // Predicated region
        $region25: #{tpu_custom_call.1} parent=11 // pred_check
          %p384 = pneg %p167
        $region26: #{tpu_custom_call.1} parent=11 // pred_check_branch
          %386 = sbr.rel (%p384) target = $region28
        $region27: #{tpu_custom_call.1} parent=11 // pred_region
          _
        $region28: #{tpu_custom_call.1} parent=11 // pred_fallthru
          _
        // Predicated region
        $region29: #{tpu_custom_call.1} parent=11 // pred_check
          %p387 = pneg %p188
        $region30: #{tpu_custom_call.1} parent=11 // pred_check_branch
          %389 = sbr.rel (%p387) target = $region32
        $region31: #{tpu_custom_call.1} parent=11 // pred_region
          %s391 = ssub.s32 2048, 2048
          %392 = vsyncadd [#allocation10], %s391
          %s393 = sshll.u32 [#allocation11], 4
          %s394 = int_to_ptr.vmem [resolvable:$true] %s393
          %399 = dma.hbm_to_vmem [thread:$0]  %s6, 2048, %s394, [#allocation10], 128, 128, 8
        $region32: #{tpu_custom_call.1} parent=11 // pred_fallthru
          _
        // Predicated region
        $region33: #{tpu_custom_call.1} parent=11 // pred_check
          %p400 = pneg %p209
        $region34: #{tpu_custom_call.1} parent=11 // pred_check_branch
          %402 = sbr.rel (%p400) target = $region36
        $region35: #{tpu_custom_call.1} parent=11 // pred_region
          _
        $region36: #{tpu_custom_call.1} parent=11 // pred_fallthru
          _
        // Predicated region
        $region37: #{tpu_custom_call.1} parent=11 // pred_check
          %p403 = pneg %p230
        $region38: #{tpu_custom_call.1} parent=11 // pred_check_branch
          %405 = sbr.rel (%p403) target = $region40
        $region39: #{tpu_custom_call.1} parent=11 // pred_region
          %s407 = ssub.s32 2048, 2048
          %408 = vsyncadd [#allocation13], %s407
          %s409 = sshll.u32 [#allocation12], 4
          %s410 = int_to_ptr.vmem [resolvable:$true] %s409
          %415 = dma.hbm_to_vmem [thread:$0]  %s8, 2048, %s410, [#allocation13], 128, 128, 8
        $region40: #{tpu_custom_call.1} parent=11 // pred_fallthru
          _
        // Predicated region
        $region41: #{tpu_custom_call.1} parent=11 // pred_check
          %p416 = pneg %p251
        $region42: #{tpu_custom_call.1} parent=11 // pred_check_branch
          %418 = sbr.rel (%p416) target = $region44
        $region43: #{tpu_custom_call.1} parent=11 // pred_region
          _
        $region44: #{tpu_custom_call.1} parent=11 // pred_fallthru
          _
        // Predicated region
        $region45: #{tpu_custom_call.1} parent=11 // pred_check
          %p419 = pneg %p272
        $region46: #{tpu_custom_call.1} parent=11 // pred_check_branch
          %421 = sbr.rel (%p419) target = $region48
        $region47: #{tpu_custom_call.1} parent=11 // pred_region
          _
        $region48: #{tpu_custom_call.1} parent=11 // pred_fallthru
          _
        // Predicated region
        $region49: #{tpu_custom_call.1} parent=11 // pred_check
          %p422 = pneg %p293
        $region50: #{tpu_custom_call.1} parent=11 // pred_check_branch
          %424 = sbr.rel (%p422) target = $region52
        $region51: #{tpu_custom_call.1} parent=11 // pred_region
          _
        $region52: #{tpu_custom_call.1} parent=11 // pred_fallthru
          _
        // Predicated region
        $region53: #{tpu_custom_call.1} parent=11 // pred_check
          %p425 = pneg %p314
        $region54: #{tpu_custom_call.1} parent=11 // pred_check_branch
          %427 = sbr.rel (%p425) target = $region56
        $region55: #{tpu_custom_call.1} parent=11 // pred_region
          _
        $region56: #{tpu_custom_call.1} parent=11 // pred_fallthru
          _
      $region12: #{tpu_custom_call.1} parent=5 // pred_fallthru
        _
      %p428 = scmp.lt.s32.totalorder %s31, 3
      // Predicated region
      $region57: #{tpu_custom_call.1} parent=5 // pred_check
        %p429 = pneg %p428
      $region58: #{tpu_custom_call.1} parent=5 // pred_check_branch
        %431 = sbr.rel (%p429) target = $region60
      $region59: #{tpu_custom_call.1} parent=5 // pred_region
        // Predicated region
        $region61: #{tpu_custom_call.1} parent=59 // pred_check
          %p432 = pneg %p51
        $region62: #{tpu_custom_call.1} parent=59 // pred_check_branch
          %434 = sbr.rel (%p432) target = $region64
        $region63: #{tpu_custom_call.1} parent=59 // pred_region
          %s435 = sand.u32 %s41, 1
          %s436 = scalar_lea.sflag [#allocation4], %s435
          %s437 = sand.u32 %s41, 1
          %s438 = smul.addr %s437, 128
          %s439 = scalar_lea.vmem [#allocation3], %s438
          %s440 = smul.u32 16, %s31
          %s442 = ssub.s32 2048, 2048
          %443 = vsyncadd %s436, %s442
          %s444 = smul.addr %s440, 128
          %s445 = scalar_lea.hbm %s0, %s444
          %s446 = sshll.u32 %s439, 4
          %s447 = int_to_ptr.vmem [resolvable:$true] %s446
          %452 = dma.hbm_to_vmem [thread:$0]  %s445, 2048, %s447, %s436, 128, 128, 8
        $region64: #{tpu_custom_call.1} parent=59 // pred_fallthru
          _
        // Predicated region
        $region65: #{tpu_custom_call.1} parent=59 // pred_check
          %p453 = pneg %p77
        $region66: #{tpu_custom_call.1} parent=59 // pred_check_branch
          %455 = sbr.rel (%p453) target = $region68
        $region67: #{tpu_custom_call.1} parent=59 // pred_region
          %s456 = sand.u32 %s31, 1
          %s457 = scalar_lea.sflag [#allocation7], %s456
          %s458 = sand.u32 %s67, 1
          %s459 = smul.addr %s458, 128
          %s460 = scalar_lea.vmem [#allocation6], %s459
          %s461 = smul.u32 16, %s31
          %s463 = ssub.s32 2048, 2048
          %464 = vsyncadd %s457, %s463
          %s465 = smul.addr %s461, 128
          %s466 = scalar_lea.hbm %s1, %s465
          %s467 = sshll.u32 %s460, 4
          %s468 = int_to_ptr.vmem [resolvable:$true] %s467
          %473 = dma.hbm_to_vmem [thread:$0]  %s466, 2048, %s468, %s457, 128, 128, 8
        $region68: #{tpu_custom_call.1} parent=59 // pred_fallthru
          _
      $region60: #{tpu_custom_call.1} parent=5 // pred_fallthru
        _
      %p474 = scmp.le.s32.totalorder 1, %s31
      %p475 = scmp.lt.s32.totalorder %s31, 4
      %p476 = pnand %p474, %p475
      %p477 = pneg %p476
      // Predicated region
      $region69: #{tpu_custom_call.1} parent=5 // pred_check
        _
      $region70: #{tpu_custom_call.1} parent=5 // pred_check_branch
        %479 = sbr.rel (%p476) target = $region72
      $region71: #{tpu_custom_call.1} parent=5 // pred_region
        %s480 = ssub.s32 %s31, 1
        %s481 = sand.u32 %s44, 1
        %s482 = scalar_lea.sflag [#allocation4], %s481
        %s483 = sand.u32 %s44, 1
        %s484 = smul.addr %s483, 128
        %s485 = scalar_lea.vmem [#allocation3], %s484
        // Predicated region
        $region73: #{tpu_custom_call.1} parent=71 // pred_check
          %p486 = pneg %p57
        $region74: #{tpu_custom_call.1} parent=71 // pred_check_branch
          %488 = sbr.rel (%p486) target = $region76
        $region75: #{tpu_custom_call.1} parent=71 // pred_region
          %489 = dma.done %s482, 2048
        $region76: #{tpu_custom_call.1} parent=71 // pred_fallthru
          _
        %s490 = sand.u32 %s36, 1
        %s491 = scalar_lea.sflag [#allocation7], %s490
        %s492 = sand.u32 %s70, 1
        %s493 = smul.addr %s492, 128
        %s494 = scalar_lea.vmem [#allocation6], %s493
        // Predicated region
        $region77: #{tpu_custom_call.1} parent=71 // pred_check
          %p495 = pneg %p83
        $region78: #{tpu_custom_call.1} parent=71 // pred_check_branch
          %497 = sbr.rel (%p495) target = $region80
        $region79: #{tpu_custom_call.1} parent=71 // pred_region
          %498 = dma.done %s491, 2048
        $region80: #{tpu_custom_call.1} parent=71 // pred_fallthru
          _
        // Predicated region
        $region81: #{tpu_custom_call.1} parent=71 // pred_check
          %p499 = pneg %p104
        $region82: #{tpu_custom_call.1} parent=71 // pred_check_branch
          %501 = sbr.rel (%p499) target = $region84
        $region83: #{tpu_custom_call.1} parent=71 // pred_region
          %502 = dma.done [#allocation7], 4096
        $region84: #{tpu_custom_call.1} parent=71 // pred_fallthru
          _
        // Predicated region
        $region85: #{tpu_custom_call.1} parent=71 // pred_check
          %p503 = pneg %p146
        $region86: #{tpu_custom_call.1} parent=71 // pred_check_branch
          %505 = sbr.rel (%p503) target = $region88
        $region87: #{tpu_custom_call.1} parent=71 // pred_region
          %506 = dma.done [#allocation10], 4096
        $region88: #{tpu_custom_call.1} parent=71 // pred_fallthru
          _
        // Predicated region
        $region89: #{tpu_custom_call.1} parent=71 // pred_check
          %p507 = pneg %p188
        $region90: #{tpu_custom_call.1} parent=71 // pred_check_branch
          %509 = sbr.rel (%p507) target = $region92
        $region91: #{tpu_custom_call.1} parent=71 // pred_region
          %510 = dma.done [#allocation10], 2048
        $region92: #{tpu_custom_call.1} parent=71 // pred_fallthru
          _
        // Predicated region
        $region93: #{tpu_custom_call.1} parent=71 // pred_check
          %p511 = pneg %p230
        $region94: #{tpu_custom_call.1} parent=71 // pred_check_branch
          %513 = sbr.rel (%p511) target = $region96
        $region95: #{tpu_custom_call.1} parent=71 // pred_region
          %514 = dma.done [#allocation13], 2048
        $region96: #{tpu_custom_call.1} parent=71 // pred_fallthru
          _
        %s515 = sand.u32 %s44, 1
        %s516 = scalar_lea.sflag [#allocation4], %s515
        %s517 = sand.u32 %s44, 1
        %s518 = smul.addr %s517, 128
        %s519 = scalar_lea.vmem [#allocation3], %s518
        %p520 = pneg %p57
        %p521 = pneg %p54
        %s522 = sand.u32 %s36, 1
        %s523 = scalar_lea.sflag [#allocation7], %s522
        %s524 = sand.u32 %s70, 1
        %s525 = smul.addr %s524, 128
        %s526 = scalar_lea.vmem [#allocation6], %s525
        %p527 = pneg %p83
        %p528 = pneg %p80
        %p529 = pneg %p104
        %p530 = pneg %p101
        %p531 = pneg %p125
        %p532 = pneg %p122
        %p533 = pneg %p146
        %p534 = pneg %p143
        %p535 = pneg %p167
        %p536 = pneg %p164
        %p537 = pneg %p188
        %p538 = pneg %p185
        %p539 = pneg %p209
        %p540 = pneg %p206
        %p541 = pneg %p230
        %p542 = pneg %p227
        %p543 = pneg %p251
        %p544 = pneg %p248
        %p545 = pneg %p272
        %p546 = pneg %p269
        %p547 = pneg %p293
        %p548 = pneg %p290
        %p549 = pneg %p314
        %p550 = pneg %p311
        %p551 = pneg %p340
        %p552 = pneg %p337
        %s553 = sand.u32 %s327, 1
        %s554 = scalar_lea.sflag [#allocation5], %s553
        %s555 = sand.u32 %s327, 1
        %s556 = scalar_lea.vmem [#allocation14], %s555
        %s557 = smul.u32 16, %s36
        %s558 = smul.u32 16, %s36
        %v559 = vld [vmem:[%s485] sm:$0xff]
        %v560 = vld [vmem:[%s485 + $0x8] sm:$0xff]
        %v561 = vld [vmem:[%s485 + $0x10] sm:$0xff]
        %v562 = vld [vmem:[%s485 + $0x18] sm:$0xff]
        %v563 = vld [vmem:[%s485 + $0x20] sm:$0xff]
        %v564 = vld [vmem:[%s485 + $0x28] sm:$0xff]
        %v565 = vld [vmem:[%s485 + $0x30] sm:$0xff]
        %v566 = vld [vmem:[%s485 + $0x38] sm:$0xff]
        %v567 = vld [vmem:[%s485 + $0x40] sm:$0xff]
        %v568 = vld [vmem:[%s485 + $0x48] sm:$0xff]
        %v569 = vld [vmem:[%s485 + $0x50] sm:$0xff]
        %v570 = vld [vmem:[%s485 + $0x58] sm:$0xff]
        %v571 = vld [vmem:[%s485 + $0x60] sm:$0xff]
        %v572 = vld [vmem:[%s485 + $0x68] sm:$0xff]
        %v573 = vld [vmem:[%s485 + $0x70] sm:$0xff]
        %v574 = vld [vmem:[%s485 + $0x78] sm:$0xff]
        %v575 = vld [vmem:[#allocation8] sm:$0xff]
        %v576 = vld [vmem:[#allocation8 + $0x8] sm:$0xff]
        %v577 = vld [vmem:[#allocation8 + $0x10] sm:$0xff]
        %v578 = vld [vmem:[#allocation8 + $0x18] sm:$0xff]
        %v579 = vld [vmem:[#allocation8 + $0x20] sm:$0xff]
        %v580 = vld [vmem:[#allocation8 + $0x28] sm:$0xff]
        %v581 = vld [vmem:[#allocation8 + $0x30] sm:$0xff]
        %v582 = vld [vmem:[#allocation8 + $0x38] sm:$0xff]
        %v583 = vld [vmem:[#allocation8 + $0x40] sm:$0xff]
        %v584 = vld [vmem:[#allocation8 + $0x48] sm:$0xff]
        %v585 = vld [vmem:[#allocation8 + $0x50] sm:$0xff]
        %v586 = vld [vmem:[#allocation8 + $0x58] sm:$0xff]
        %v587 = vld [vmem:[#allocation8 + $0x60] sm:$0xff]
        %v588 = vld [vmem:[#allocation8 + $0x68] sm:$0xff]
        %v589 = vld [vmem:[#allocation8 + $0x70] sm:$0xff]
        %v590 = vld [vmem:[#allocation8 + $0x78] sm:$0xff]
        %v591 = vld [vmem:[#allocation8 + $0x80] sm:$0xff]
        %v592 = vld [vmem:[#allocation8 + $0x88] sm:$0xff]
        %v593 = vld [vmem:[#allocation8 + $0x90] sm:$0xff]
        %v594 = vld [vmem:[#allocation8 + $0x98] sm:$0xff]
        %v595 = vld [vmem:[#allocation8 + $0xa0] sm:$0xff]
        %v596 = vld [vmem:[#allocation8 + $0xa8] sm:$0xff]
        %v597 = vld [vmem:[#allocation8 + $0xb0] sm:$0xff]
        %v598 = vld [vmem:[#allocation8 + $0xb8] sm:$0xff]
        %v599 = vld [vmem:[#allocation8 + $0xc0] sm:$0xff]
        %v600 = vld [vmem:[#allocation8 + $0xc8] sm:$0xff]
        %v601 = vld [vmem:[#allocation8 + $0xd0] sm:$0xff]
        %v602 = vld [vmem:[#allocation8 + $0xd8] sm:$0xff]
        %v603 = vld [vmem:[#allocation8 + $0xe0] sm:$0xff]
        %v604 = vld [vmem:[#allocation8 + $0xe8] sm:$0xff]
        %v605 = vld [vmem:[#allocation8 + $0xf0] sm:$0xff]
        %v606 = vld [vmem:[#allocation8 + $0xf8] sm:$0xff]
        %v607 = vld [vmem:[%s3] sm:$0x3]
        %v609 = vlaneseq
        %v610 = vshrl.u32 %v609, 7
        %v611 = vsub.s32 0, %v610
        %v612 = vrot.slane %v607, %v611
        %v613 = vlaneseq
        %v614 = vshrl.u32 %v613, 7
        %v615 = vsub.s32 1, %v614
        %v616 = vrot.slane %v607, %v615
        %619 = vmatprep.subr.mxu0 %v576
        %620 = vmatpush1.msra.mxu0 %v575
        %621 = vmatprep.subr.mxu0 %v578
        %622 = vmatpush1.msra.mxu0 %v577
        %623 = vmatprep.subr.mxu0 %v580
        %624 = vmatpush1.msra.mxu0 %v579
        %625 = vmatprep.subr.mxu0 %v582
        %626 = vmatpush1.msra.mxu0 %v581
        %627 = vmatprep.subr.mxu0 %v584
        %628 = vmatpush1.msra.mxu0 %v583
        %629 = vmatprep.subr.mxu0 %v586
        %630 = vmatpush1.msra.mxu0 %v585
        %631 = vmatprep.subr.mxu0 %v588
        %632 = vmatpush1.msra.mxu0 %v587
        %633 = vmatprep.subr.mxu0 %v590
        %634 = vmatpush1.msra.mxu0 %v589
        %635 = vmatprep.subr.mxu0 %v592
        %636 = vmatpush1.msra.mxu0 %v591
        %637 = vmatprep.subr.mxu0 %v594
        %638 = vmatpush1.msra.mxu0 %v593
        %639 = vmatprep.subr.mxu0 %v596
        %640 = vmatpush1.msra.mxu0 %v595
        %641 = vmatprep.subr.mxu0 %v598
        %642 = vmatpush1.msra.mxu0 %v597
        %643 = vmatprep.subr.mxu0 %v600
        %644 = vmatpush1.msra.mxu0 %v599
        %645 = vmatprep.subr.mxu0 %v602
        %646 = vmatpush1.msra.mxu0 %v601
        %647 = vmatprep.subr.mxu0 %v604
        %648 = vmatpush1.msra.mxu0 %v603
        %649 = vmatprep.subr.mxu0 %v606
        %650 = vmatpush1.msra.mxu0 %v605
        %651 = vmatprep.subr.mxu0 0.0
        %652 = vmatpush1.msra.mxu0 0.0
        %653 = vmatprep.subr.mxu0 0.0
        %654 = vmatpush1.msra.mxu0 0.0
        %655 = vmatprep.subr.mxu0 0.0
        %656 = vmatpush1.msra.mxu0 0.0
        %657 = vmatprep.subr.mxu0 0.0
        %658 = vmatpush1.msra.mxu0 0.0
        %659 = vmatprep.subr.mxu0 0.0
        %660 = vmatpush1.msra.mxu0 0.0
        %661 = vmatprep.subr.mxu0 0.0
        %662 = vmatpush1.msra.mxu0 0.0
        %663 = vmatprep.subr.mxu0 0.0
        %664 = vmatpush1.msra.mxu0 0.0
        %665 = vmatprep.subr.mxu0 0.0
        %666 = vmatpush1.msra.mxu0 0.0
        %667 = vmatprep.subr.mxu0 0.0
        %668 = vmatpush1.msra.mxu0 0.0
        %669 = vmatprep.subr.mxu0 0.0
        %670 = vmatpush1.msra.mxu0 0.0
        %671 = vmatprep.subr.mxu0 0.0
        %672 = vmatpush1.msra.mxu0 0.0
        %673 = vmatprep.subr.mxu0 0.0
        %674 = vmatpush1.msra.mxu0 0.0
        %675 = vmatprep.subr.mxu0 0.0
        %676 = vmatpush1.msra.mxu0 0.0
        %677 = vmatprep.subr.mxu0 0.0
        %678 = vmatpush1.msra.mxu0 0.0
        %679 = vmatprep.subr.mxu0 0.0
        %680 = vmatpush1.msra.mxu0 0.0
        %681 = vmatprep.subr.mxu0 0.0
        %682 = vmatpush1.msra.mxu0 0.0
        %683 = vmatprep.mubr.f32.mxu0 0.0
        %684 = vmatmul.mubr.f32.gmra.mrb[0].mxu0 %v559
        %v685 = vpop.f32.mrb[0].mxu0
        %v686 = vadd.f32 %v612, %v685
        %v687 = vpop.f32.mrb[0].mxu0
        %v688 = vadd.f32 %v616, %v687
        %689 = vmatprep.mubr.f32.mxu0 0.0
        %690 = vmatmul.mubr.f32.gmra.mrb[0].mxu0 %v560
        %v691 = vpop.f32.mrb[0].mxu0
        %v692 = vadd.f32 %v612, %v691
        %v693 = vpop.f32.mrb[0].mxu0
        %v694 = vadd.f32 %v616, %v693
        %695 = vmatprep.mubr.f32.mxu0 0.0
        %696 = vmatmul.mubr.f32.gmra.mrb[0].mxu0 %v561
        %v697 = vpop.f32.mrb[0].mxu0
        %v698 = vadd.f32 %v612, %v697
        %v699 = vpop.f32.mrb[0].mxu0
        %v700 = vadd.f32 %v616, %v699
        %701 = vmatprep.mubr.f32.mxu0 0.0
        %702 = vmatmul.mubr.f32.gmra.mrb[0].mxu0 %v562
        %v703 = vpop.f32.mrb[0].mxu0
        %v704 = vadd.f32 %v612, %v703
        %v705 = vpop.f32.mrb[0].mxu0
        %v706 = vadd.f32 %v616, %v705
        %707 = vmatprep.mubr.f32.mxu0 0.0
        %708 = vmatmul.mubr.f32.gmra.mrb[0].mxu0 %v563
        %v709 = vpop.f32.mrb[0].mxu0
        %v710 = vadd.f32 %v612, %v709
        %v711 = vpop.f32.mrb[0].mxu0
        %v712 = vadd.f32 %v616, %v711
        %713 = vmatprep.mubr.f32.mxu0 0.0
        %714 = vmatmul.mubr.f32.gmra.mrb[0].mxu0 %v564
        %v715 = vpop.f32.mrb[0].mxu0
        %v716 = vadd.f32 %v612, %v715
        %v717 = vpop.f32.mrb[0].mxu0
        %v718 = vadd.f32 %v616, %v717
        %719 = vmatprep.mubr.f32.mxu0 0.0
        %720 = vmatmul.mubr.f32.gmra.mrb[0].mxu0 %v565
        %v721 = vpop.f32.mrb[0].mxu0
        %v722 = vadd.f32 %v612, %v721
        %v723 = vpop.f32.mrb[0].mxu0
        %v724 = vadd.f32 %v616, %v723
        %725 = vmatprep.mubr.f32.mxu0 0.0
        %726 = vmatmul.mubr.f32.gmra.mrb[0].mxu0 %v566
        %v727 = vpop.f32.mrb[0].mxu0
        %v728 = vadd.f32 %v612, %v727
        %v729 = vpop.f32.mrb[0].mxu0
        %v730 = vadd.f32 %v616, %v729
        %731 = vmatprep.mubr.f32.mxu0 0.0
        %732 = vmatmul.mubr.f32.gmra.mrb[0].mxu0 %v567
        %v733 = vpop.f32.mrb[0].mxu0
        %v734 = vadd.f32 %v612, %v733
        %v735 = vpop.f32.mrb[0].mxu0
        %v736 = vadd.f32 %v616, %v735
        %737 = vmatprep.mubr.f32.mxu0 0.0
        %738 = vmatmul.mubr.f32.gmra.mrb[0].mxu0 %v568
        %v739 = vpop.f32.mrb[0].mxu0
        %v740 = vadd.f32 %v612, %v739
        %v741 = vpop.f32.mrb[0].mxu0
        %v742 = vadd.f32 %v616, %v741
        %743 = vmatprep.mubr.f32.mxu0 0.0
        %744 = vmatmul.mubr.f32.gmra.mrb[0].mxu0 %v569
        %v745 = vpop.f32.mrb[0].mxu0
        %v746 = vadd.f32 %v612, %v745
        %v747 = vpop.f32.mrb[0].mxu0
        %v748 = vadd.f32 %v616, %v747
        %749 = vmatprep.mubr.f32.mxu0 0.0
        %750 = vmatmul.mubr.f32.gmra.mrb[0].mxu0 %v570
        %v751 = vpop.f32.mrb[0].mxu0
        %v752 = vadd.f32 %v612, %v751
        %v753 = vpop.f32.mrb[0].mxu0
        %v754 = vadd.f32 %v616, %v753
        %755 = vmatprep.mubr.f32.mxu0 0.0
        %756 = vmatmul.mubr.f32.gmra.mrb[0].mxu0 %v571
        %v757 = vpop.f32.mrb[0].mxu0
        %v758 = vadd.f32 %v612, %v757
        %v759 = vpop.f32.mrb[0].mxu0
        %v760 = vadd.f32 %v616, %v759
        %761 = vmatprep.mubr.f32.mxu0 0.0
        %762 = vmatmul.mubr.f32.gmra.mrb[0].mxu0 %v572
        %v763 = vpop.f32.mrb[0].mxu0
        %v764 = vadd.f32 %v612, %v763
        %v765 = vpop.f32.mrb[0].mxu0
        %v766 = vadd.f32 %v616, %v765
        %767 = vmatprep.mubr.f32.mxu0 0.0
        %768 = vmatmul.mubr.f32.gmra.mrb[0].mxu0 %v573
        %v769 = vpop.f32.mrb[0].mxu0
        %v770 = vadd.f32 %v612, %v769
        %v771 = vpop.f32.mrb[0].mxu0
        %v772 = vadd.f32 %v616, %v771
        %773 = vmatprep.mubr.f32.mxu0 0.0
        %774 = vmatmul.mubr.f32.gmra.mrb[0].mxu0 %v574
        %v775 = vpop.f32.mrb[0].mxu0
        %v776 = vadd.f32 %v612, %v775
        %v777 = vpop.f32.mrb[0].mxu0
        %v778 = vadd.f32 %v616, %v777
        %779 = vdwg.mxu0
        %v780 = vmax.f32 %v688, 0.0
        %v781 = vmax.f32 %v694, 0.0
        %v782 = vmax.f32 %v700, 0.0
        %v783 = vmax.f32 %v706, 0.0
        %v784 = vmax.f32 %v712, 0.0
        %v785 = vmax.f32 %v718, 0.0
        %v786 = vmax.f32 %v724, 0.0
        %v787 = vmax.f32 %v730, 0.0
        %v788 = vmax.f32 %v736, 0.0
        %v789 = vmax.f32 %v742, 0.0
        %v790 = vmax.f32 %v748, 0.0
        %v791 = vmax.f32 %v754, 0.0
        %v792 = vmax.f32 %v760, 0.0
        %v793 = vmax.f32 %v766, 0.0
        %v794 = vmax.f32 %v772, 0.0
        %v795 = vmax.f32 %v778, 0.0
        %v796 = vmul.f32 %v559, %v686
        %v797 = vmul.f32 %v560, %v692
        %v798 = vmul.f32 %v561, %v698
        %v799 = vmul.f32 %v562, %v704
        %v800 = vmul.f32 %v563, %v710
        %v801 = vmul.f32 %v564, %v716
        %v802 = vmul.f32 %v565, %v722
        %v803 = vmul.f32 %v566, %v728
        %v804 = vmul.f32 %v567, %v734
        %v805 = vmul.f32 %v568, %v740
        %v806 = vmul.f32 %v569, %v746
        %v807 = vmul.f32 %v570, %v752
        %v808 = vmul.f32 %v571, %v758
        %v809 = vmul.f32 %v572, %v764
        %v810 = vmul.f32 %v573, %v770
        %v811 = vmul.f32 %v574, %v776
        %v812 = vadd.f32 %v559, %v796
        %v813 = vadd.f32 %v560, %v797
        %v814 = vadd.f32 %v561, %v798
        %v815 = vadd.f32 %v562, %v799
        %v816 = vadd.f32 %v563, %v800
        %v817 = vadd.f32 %v564, %v801
        %v818 = vadd.f32 %v565, %v802
        %v819 = vadd.f32 %v566, %v803
        %v820 = vadd.f32 %v567, %v804
        %v821 = vadd.f32 %v568, %v805
        %v822 = vadd.f32 %v569, %v806
        %v823 = vadd.f32 %v570, %v807
        %v824 = vadd.f32 %v571, %v808
        %v825 = vadd.f32 %v572, %v809
        %v826 = vadd.f32 %v573, %v810
        %v827 = vadd.f32 %v574, %v811
        %v828 = vld [vmem:[#allocation9] sm:$0xff]
        %v829 = vld [vmem:[#allocation9 + $0x8] sm:$0xff]
        %v830 = vld [vmem:[#allocation9 + $0x10] sm:$0xff]
        %v831 = vld [vmem:[#allocation9 + $0x18] sm:$0xff]
        %v832 = vld [vmem:[#allocation9 + $0x20] sm:$0xff]
        %v833 = vld [vmem:[#allocation9 + $0x28] sm:$0xff]
        %v834 = vld [vmem:[#allocation9 + $0x30] sm:$0xff]
        %v835 = vld [vmem:[#allocation9 + $0x38] sm:$0xff]
        %v836 = vld [vmem:[#allocation9 + $0x40] sm:$0xff]
        %v837 = vld [vmem:[#allocation9 + $0x48] sm:$0xff]
        %v838 = vld [vmem:[#allocation9 + $0x50] sm:$0xff]
        %v839 = vld [vmem:[#allocation9 + $0x58] sm:$0xff]
        %v840 = vld [vmem:[#allocation9 + $0x60] sm:$0xff]
        %v841 = vld [vmem:[#allocation9 + $0x68] sm:$0xff]
        %v842 = vld [vmem:[#allocation9 + $0x70] sm:$0xff]
        %v843 = vld [vmem:[#allocation9 + $0x78] sm:$0xff]
        %v844 = vld [vmem:[%s5] sm:$0x1]
        %v846 = vlaneseq
        %v847 = vshrl.u32 %v846, 7
        %v848 = vsub.s32 0, %v847
        %v849 = vrot.slane %v844, %v848
        %851 = vmatprep.subr.mxu0 0.0
        %852 = vmatpush1.msra.mxu0 %v828
        %853 = vmatprep.subr.mxu0 0.0
        %854 = vmatpush1.msra.mxu0 %v829
        %855 = vmatprep.subr.mxu0 0.0
        %856 = vmatpush1.msra.mxu0 %v830
        %857 = vmatprep.subr.mxu0 0.0
        %858 = vmatpush1.msra.mxu0 %v831
        %859 = vmatprep.subr.mxu0 0.0
        %860 = vmatpush1.msra.mxu0 %v832
        %861 = vmatprep.subr.mxu0 0.0
        %862 = vmatpush1.msra.mxu0 %v833
        %863 = vmatprep.subr.mxu0 0.0
        %864 = vmatpush1.msra.mxu0 %v834
        %865 = vmatprep.subr.mxu0 0.0
        %866 = vmatpush1.msra.mxu0 %v835
        %867 = vmatprep.subr.mxu0 0.0
        %868 = vmatpush1.msra.mxu0 %v836
        %869 = vmatprep.subr.mxu0 0.0
        %870 = vmatpush1.msra.mxu0 %v837
        %871 = vmatprep.subr.mxu0 0.0
        %872 = vmatpush1.msra.mxu0 %v838
        %873 = vmatprep.subr.mxu0 0.0
        %874 = vmatpush1.msra.mxu0 %v839
        %875 = vmatprep.subr.mxu0 0.0
        %876 = vmatpush1.msra.mxu0 %v840
        %877 = vmatprep.subr.mxu0 0.0
        %878 = vmatpush1.msra.mxu0 %v841
        %879 = vmatprep.subr.mxu0 0.0
        %880 = vmatpush1.msra.mxu0 %v842
        %881 = vmatprep.subr.mxu0 0.0
        %882 = vmatpush1.msra.mxu0 %v843
        %883 = vmatprep.subr.mxu0 0.0
        %884 = vmatpush1.msra.mxu0 0.0
        %885 = vmatprep.subr.mxu0 0.0
        %886 = vmatpush1.msra.mxu0 0.0
        %887 = vmatprep.subr.mxu0 0.0
        %888 = vmatpush1.msra.mxu0 0.0
        %889 = vmatprep.subr.mxu0 0.0
        %890 = vmatpush1.msra.mxu0 0.0
        %891 = vmatprep.subr.mxu0 0.0
        %892 = vmatpush1.msra.mxu0 0.0
        %893 = vmatprep.subr.mxu0 0.0
        %894 = vmatpush1.msra.mxu0 0.0
        %895 = vmatprep.subr.mxu0 0.0
        %896 = vmatpush1.msra.mxu0 0.0
        %897 = vmatprep.subr.mxu0 0.0
        %898 = vmatpush1.msra.mxu0 0.0
        %899 = vmatprep.subr.mxu0 0.0
        %900 = vmatpush1.msra.mxu0 0.0
        %901 = vmatprep.subr.mxu0 0.0
        %902 = vmatpush1.msra.mxu0 0.0
        %903 = vmatprep.subr.mxu0 0.0
        %904 = vmatpush1.msra.mxu0 0.0
        %905 = vmatprep.subr.mxu0 0.0
        %906 = vmatpush1.msra.mxu0 0.0
        %907 = vmatprep.subr.mxu0 0.0
        %908 = vmatpush1.msra.mxu0 0.0
        %909 = vmatprep.subr.mxu0 0.0
        %910 = vmatpush1.msra.mxu0 0.0
        %911 = vmatprep.subr.mxu0 0.0
        %912 = vmatpush1.msra.mxu0 0.0
        %913 = vmatprep.subr.mxu0 0.0
        %914 = vmatpush1.msra.mxu0 0.0
        %915 = vmatprep.mubr.f32.mxu0 0.0
        %916 = vmatmul.mubr.f32.gmra.mrb[0].mxu0 %v812
        %v917 = vpop.f32.mrb[0].mxu0
        %v918 = vadd.f32 %v849, %v917
        %v919 = vpop.f32.mrb[0].mxu0
        %920 = vmatprep.mubr.f32.mxu0 0.0
        %921 = vmatmul.mubr.f32.gmra.mrb[0].mxu0 %v813
        %v922 = vpop.f32.mrb[0].mxu0
        %v923 = vadd.f32 %v849, %v922
        %v924 = vpop.f32.mrb[0].mxu0
        %925 = vmatprep.mubr.f32.mxu0 0.0
        %926 = vmatmul.mubr.f32.gmra.mrb[0].mxu0 %v814
        %v927 = vpop.f32.mrb[0].mxu0
        %v928 = vadd.f32 %v849, %v927
        %v929 = vpop.f32.mrb[0].mxu0
        %930 = vmatprep.mubr.f32.mxu0 0.0
        %931 = vmatmul.mubr.f32.gmra.mrb[0].mxu0 %v815
        %v932 = vpop.f32.mrb[0].mxu0
        %v933 = vadd.f32 %v849, %v932
        %v934 = vpop.f32.mrb[0].mxu0
        %935 = vmatprep.mubr.f32.mxu0 0.0
        %936 = vmatmul.mubr.f32.gmra.mrb[0].mxu0 %v816
        %v937 = vpop.f32.mrb[0].mxu0
        %v938 = vadd.f32 %v849, %v937
        %v939 = vpop.f32.mrb[0].mxu0
        %940 = vmatprep.mubr.f32.mxu0 0.0
        %941 = vmatmul.mubr.f32.gmra.mrb[0].mxu0 %v817
        %v942 = vpop.f32.mrb[0].mxu0
        %v943 = vadd.f32 %v849, %v942
        %v944 = vpop.f32.mrb[0].mxu0
        %945 = vmatprep.mubr.f32.mxu0 0.0
        %946 = vmatmul.mubr.f32.gmra.mrb[0].mxu0 %v818
        %v947 = vpop.f32.mrb[0].mxu0
        %v948 = vadd.f32 %v849, %v947
        %v949 = vpop.f32.mrb[0].mxu0
        %950 = vmatprep.mubr.f32.mxu0 0.0
        %951 = vmatmul.mubr.f32.gmra.mrb[0].mxu0 %v819
        %v952 = vpop.f32.mrb[0].mxu0
        %v953 = vadd.f32 %v849, %v952
        %v954 = vpop.f32.mrb[0].mxu0
        %955 = vmatprep.mubr.f32.mxu0 0.0
        %956 = vmatmul.mubr.f32.gmra.mrb[0].mxu0 %v820
        %v957 = vpop.f32.mrb[0].mxu0
        %v958 = vadd.f32 %v849, %v957
        %v959 = vpop.f32.mrb[0].mxu0
        %960 = vmatprep.mubr.f32.mxu0 0.0
        %961 = vmatmul.mubr.f32.gmra.mrb[0].mxu0 %v821
        %v962 = vpop.f32.mrb[0].mxu0
        %v963 = vadd.f32 %v849, %v962
        %v964 = vpop.f32.mrb[0].mxu0
        %965 = vmatprep.mubr.f32.mxu0 0.0
        %966 = vmatmul.mubr.f32.gmra.mrb[0].mxu0 %v822
        %v967 = vpop.f32.mrb[0].mxu0
        %v968 = vadd.f32 %v849, %v967
        %v969 = vpop.f32.mrb[0].mxu0
        %970 = vmatprep.mubr.f32.mxu0 0.0
        %971 = vmatmul.mubr.f32.gmra.mrb[0].mxu0 %v823
        %v972 = vpop.f32.mrb[0].mxu0
        %v973 = vadd.f32 %v849, %v972
        %v974 = vpop.f32.mrb[0].mxu0
        %975 = vmatprep.mubr.f32.mxu0 0.0
        %976 = vmatmul.mubr.f32.gmra.mrb[0].mxu0 %v824
        %v977 = vpop.f32.mrb[0].mxu0
        %v978 = vadd.f32 %v849, %v977
        %v979 = vpop.f32.mrb[0].mxu0
        %980 = vmatprep.mubr.f32.mxu0 0.0
        %981 = vmatmul.mubr.f32.gmra.mrb[0].mxu0 %v825
        %v982 = vpop.f32.mrb[0].mxu0
        %v983 = vadd.f32 %v849, %v982
        %v984 = vpop.f32.mrb[0].mxu0
        %985 = vmatprep.mubr.f32.mxu0 0.0
        %986 = vmatmul.mubr.f32.gmra.mrb[0].mxu0 %v826
        %v987 = vpop.f32.mrb[0].mxu0
        %v988 = vadd.f32 %v849, %v987
        %v989 = vpop.f32.mrb[0].mxu0
        %990 = vmatprep.mubr.f32.mxu0 0.0
        %991 = vmatmul.mubr.f32.gmra.mrb[0].mxu0 %v827
        %v992 = vpop.f32.mrb[0].mxu0
        %v993 = vadd.f32 %v849, %v992
        %v994 = vpop.f32.mrb[0].mxu0
        %995 = vdwg.mxu0
        %v996 = vmul.f32 %v559, %v918
        %v997 = vmul.f32 %v560, %v923
        %v998 = vmul.f32 %v561, %v928
        %v999 = vmul.f32 %v562, %v933
        %v1000 = vmul.f32 %v563, %v938
        %v1001 = vmul.f32 %v564, %v943
        %v1002 = vmul.f32 %v565, %v948
        %v1003 = vmul.f32 %v566, %v953
        %v1004 = vmul.f32 %v567, %v958
        %v1005 = vmul.f32 %v568, %v963
        %v1006 = vmul.f32 %v569, %v968
        %v1007 = vmul.f32 %v570, %v973
        %v1008 = vmul.f32 %v571, %v978
        %v1009 = vmul.f32 %v572, %v983
        %v1010 = vmul.f32 %v573, %v988
        %v1011 = vmul.f32 %v574, %v993
        %v1012 = vadd.f32 %v812, %v996
        %v1013 = vadd.f32 %v813, %v997
        %v1014 = vadd.f32 %v814, %v998
        %v1015 = vadd.f32 %v815, %v999
        %v1016 = vadd.f32 %v816, %v1000
        %v1017 = vadd.f32 %v817, %v1001
        %v1018 = vadd.f32 %v818, %v1002
        %v1019 = vadd.f32 %v819, %v1003
        %v1020 = vadd.f32 %v820, %v1004
        %v1021 = vadd.f32 %v821, %v1005
        %v1022 = vadd.f32 %v822, %v1006
        %v1023 = vadd.f32 %v823, %v1007
        %v1024 = vadd.f32 %v824, %v1008
        %v1025 = vadd.f32 %v825, %v1009
        %v1026 = vadd.f32 %v826, %v1010
        %v1027 = vadd.f32 %v827, %v1011
        %s1028 = scalar_lea.vmem [#allocation9], 128
        %v1029 = vld [vmem:[%s1028] sm:$0xff]
        %v1030 = vld [vmem:[%s1028 + $0x8] sm:$0xff]
        %v1031 = vld [vmem:[%s1028 + $0x10] sm:$0xff]
        %v1032 = vld [vmem:[%s1028 + $0x18] sm:$0xff]
        %v1033 = vld [vmem:[%s1028 + $0x20] sm:$0xff]
        %v1034 = vld [vmem:[%s1028 + $0x28] sm:$0xff]
        %v1035 = vld [vmem:[%s1028 + $0x30] sm:$0xff]
        %v1036 = vld [vmem:[%s1028 + $0x38] sm:$0xff]
        %v1037 = vld [vmem:[%s1028 + $0x40] sm:$0xff]
        %v1038 = vld [vmem:[%s1028 + $0x48] sm:$0xff]
        %v1039 = vld [vmem:[%s1028 + $0x50] sm:$0xff]
        %v1040 = vld [vmem:[%s1028 + $0x58] sm:$0xff]
        %v1041 = vld [vmem:[%s1028 + $0x60] sm:$0xff]
        %v1042 = vld [vmem:[%s1028 + $0x68] sm:$0xff]
        %v1043 = vld [vmem:[%s1028 + $0x70] sm:$0xff]
        %v1044 = vld [vmem:[%s1028 + $0x78] sm:$0xff]
        %s1045 = scalar_lea.vmem %s5, 1
        %v1046 = vld [vmem:[%s1045] sm:$0x1]
        %v1048 = vlaneseq
        %v1049 = vshrl.u32 %v1048, 7
        %v1050 = vsub.s32 0, %v1049
        %v1051 = vrot.slane %v1046, %v1050
        %1053 = vmatprep.subr.mxu0 0.0
        %1054 = vmatpush1.msra.mxu0 %v1029
        %1055 = vmatprep.subr.mxu0 0.0
        %1056 = vmatpush1.msra.mxu0 %v1030
        %1057 = vmatprep.subr.mxu0 0.0
        %1058 = vmatpush1.msra.mxu0 %v1031
        %1059 = vmatprep.subr.mxu0 0.0
        %1060 = vmatpush1.msra.mxu0 %v1032
        %1061 = vmatprep.subr.mxu0 0.0
        %1062 = vmatpush1.msra.mxu0 %v1033
        %1063 = vmatprep.subr.mxu0 0.0
        %1064 = vmatpush1.msra.mxu0 %v1034
        %1065 = vmatprep.subr.mxu0 0.0
        %1066 = vmatpush1.msra.mxu0 %v1035
        %1067 = vmatprep.subr.mxu0 0.0
        %1068 = vmatpush1.msra.mxu0 %v1036
        %1069 = vmatprep.subr.mxu0 0.0
        %1070 = vmatpush1.msra.mxu0 %v1037
        %1071 = vmatprep.subr.mxu0 0.0
        %1072 = vmatpush1.msra.mxu0 %v1038
        %1073 = vmatprep.subr.mxu0 0.0
        %1074 = vmatpush1.msra.mxu0 %v1039
        %1075 = vmatprep.subr.mxu0 0.0
        %1076 = vmatpush1.msra.mxu0 %v1040
        %1077 = vmatprep.subr.mxu0 0.0
        %1078 = vmatpush1.msra.mxu0 %v1041
        %1079 = vmatprep.subr.mxu0 0.0
        %1080 = vmatpush1.msra.mxu0 %v1042
        %1081 = vmatprep.subr.mxu0 0.0
        %1082 = vmatpush1.msra.mxu0 %v1043
        %1083 = vmatprep.subr.mxu0 0.0
        %1084 = vmatpush1.msra.mxu0 %v1044
        %1085 = vmatprep.subr.mxu0 0.0
        %1086 = vmatpush1.msra.mxu0 0.0
        %1087 = vmatprep.subr.mxu0 0.0
        %1088 = vmatpush1.msra.mxu0 0.0
        %1089 = vmatprep.subr.mxu0 0.0
        %1090 = vmatpush1.msra.mxu0 0.0
        %1091 = vmatprep.subr.mxu0 0.0
        %1092 = vmatpush1.msra.mxu0 0.0
        %1093 = vmatprep.subr.mxu0 0.0
        %1094 = vmatpush1.msra.mxu0 0.0
        %1095 = vmatprep.subr.mxu0 0.0
        %1096 = vmatpush1.msra.mxu0 0.0
        %1097 = vmatprep.subr.mxu0 0.0
        %1098 = vmatpush1.msra.mxu0 0.0
        %1099 = vmatprep.subr.mxu0 0.0
        %1100 = vmatpush1.msra.mxu0 0.0
        %1101 = vmatprep.subr.mxu0 0.0
        %1102 = vmatpush1.msra.mxu0 0.0
        %1103 = vmatprep.subr.mxu0 0.0
        %1104 = vmatpush1.msra.mxu0 0.0
        %1105 = vmatprep.subr.mxu0 0.0
        %1106 = vmatpush1.msra.mxu0 0.0
        %1107 = vmatprep.subr.mxu0 0.0
        %1108 = vmatpush1.msra.mxu0 0.0
        %1109 = vmatprep.subr.mxu0 0.0
        %1110 = vmatpush1.msra.mxu0 0.0
        %1111 = vmatprep.subr.mxu0 0.0
        %1112 = vmatpush1.msra.mxu0 0.0
        %1113 = vmatprep.subr.mxu0 0.0
        %1114 = vmatpush1.msra.mxu0 0.0
        %1115 = vmatprep.subr.mxu0 0.0
        %1116 = vmatpush1.msra.mxu0 0.0
        %1117 = vmatprep.mubr.f32.mxu0 0.0
        %1118 = vmatmul.mubr.f32.gmra.mrb[0].mxu0 %v1012
        %v1119 = vpop.f32.mrb[0].mxu0
        %v1120 = vadd.f32 %v1051, %v1119
        %v1121 = vpop.f32.mrb[0].mxu0
        %1122 = vmatprep.mubr.f32.mxu0 0.0
        %1123 = vmatmul.mubr.f32.gmra.mrb[0].mxu0 %v1013
        %v1124 = vpop.f32.mrb[0].mxu0
        %v1125 = vadd.f32 %v1051, %v1124
        %v1126 = vpop.f32.mrb[0].mxu0
        %1127 = vmatprep.mubr.f32.mxu0 0.0
        %1128 = vmatmul.mubr.f32.gmra.mrb[0].mxu0 %v1014
        %v1129 = vpop.f32.mrb[0].mxu0
        %v1130 = vadd.f32 %v1051, %v1129
        %v1131 = vpop.f32.mrb[0].mxu0
        %1132 = vmatprep.mubr.f32.mxu0 0.0
        %1133 = vmatmul.mubr.f32.gmra.mrb[0].mxu0 %v1015
        %v1134 = vpop.f32.mrb[0].mxu0
        %v1135 = vadd.f32 %v1051, %v1134
        %v1136 = vpop.f32.mrb[0].mxu0
        %1137 = vmatprep.mubr.f32.mxu0 0.0
        %1138 = vmatmul.mubr.f32.gmra.mrb[0].mxu0 %v1016
        %v1139 = vpop.f32.mrb[0].mxu0
        %v1140 = vadd.f32 %v1051, %v1139
        %v1141 = vpop.f32.mrb[0].mxu0
        %1142 = vmatprep.mubr.f32.mxu0 0.0
        %1143 = vmatmul.mubr.f32.gmra.mrb[0].mxu0 %v1017
        %v1144 = vpop.f32.mrb[0].mxu0
        %v1145 = vadd.f32 %v1051, %v1144
        %v1146 = vpop.f32.mrb[0].mxu0
        %1147 = vmatprep.mubr.f32.mxu0 0.0
        %1148 = vmatmul.mubr.f32.gmra.mrb[0].mxu0 %v1018
        %v1149 = vpop.f32.mrb[0].mxu0
        %v1150 = vadd.f32 %v1051, %v1149
        %v1151 = vpop.f32.mrb[0].mxu0
        %1152 = vmatprep.mubr.f32.mxu0 0.0
        %1153 = vmatmul.mubr.f32.gmra.mrb[0].mxu0 %v1019
        %v1154 = vpop.f32.mrb[0].mxu0
        %v1155 = vadd.f32 %v1051, %v1154
        %v1156 = vpop.f32.mrb[0].mxu0
        %1157 = vmatprep.mubr.f32.mxu0 0.0
        %1158 = vmatmul.mubr.f32.gmra.mrb[0].mxu0 %v1020
        %v1159 = vpop.f32.mrb[0].mxu0
        %v1160 = vadd.f32 %v1051, %v1159
        %v1161 = vpop.f32.mrb[0].mxu0
        %1162 = vmatprep.mubr.f32.mxu0 0.0
        %1163 = vmatmul.mubr.f32.gmra.mrb[0].mxu0 %v1021
        %v1164 = vpop.f32.mrb[0].mxu0
        %v1165 = vadd.f32 %v1051, %v1164
        %v1166 = vpop.f32.mrb[0].mxu0
        %1167 = vmatprep.mubr.f32.mxu0 0.0
        %1168 = vmatmul.mubr.f32.gmra.mrb[0].mxu0 %v1022
        %v1169 = vpop.f32.mrb[0].mxu0
        %v1170 = vadd.f32 %v1051, %v1169
        %v1171 = vpop.f32.mrb[0].mxu0
        %1172 = vmatprep.mubr.f32.mxu0 0.0
        %1173 = vmatmul.mubr.f32.gmra.mrb[0].mxu0 %v1023
        %v1174 = vpop.f32.mrb[0].mxu0
        %v1175 = vadd.f32 %v1051, %v1174
        %v1176 = vpop.f32.mrb[0].mxu0
        %1177 = vmatprep.mubr.f32.mxu0 0.0
        %1178 = vmatmul.mubr.f32.gmra.mrb[0].mxu0 %v1024
        %v1179 = vpop.f32.mrb[0].mxu0
        %v1180 = vadd.f32 %v1051, %v1179
        %v1181 = vpop.f32.mrb[0].mxu0
        %1182 = vmatprep.mubr.f32.mxu0 0.0
        %1183 = vmatmul.mubr.f32.gmra.mrb[0].mxu0 %v1025
        %v1184 = vpop.f32.mrb[0].mxu0
        %v1185 = vadd.f32 %v1051, %v1184
        %v1186 = vpop.f32.mrb[0].mxu0
        %1187 = vmatprep.mubr.f32.mxu0 0.0
        %1188 = vmatmul.mubr.f32.gmra.mrb[0].mxu0 %v1026
        %v1189 = vpop.f32.mrb[0].mxu0
        %v1190 = vadd.f32 %v1051, %v1189
        %v1191 = vpop.f32.mrb[0].mxu0
        %1192 = vmatprep.mubr.f32.mxu0 0.0
        %1193 = vmatmul.mubr.f32.gmra.mrb[0].mxu0 %v1027
        %v1194 = vpop.f32.mrb[0].mxu0
        %v1195 = vadd.f32 %v1051, %v1194
        %v1196 = vpop.f32.mrb[0].mxu0
        %1197 = vdwg.mxu0
        %v1198 = vmul.f32 %v559, %v1120
        %v1199 = vmul.f32 %v560, %v1125
        %v1200 = vmul.f32 %v561, %v1130
        %v1201 = vmul.f32 %v562, %v1135
        %v1202 = vmul.f32 %v563, %v1140
        %v1203 = vmul.f32 %v564, %v1145
        %v1204 = vmul.f32 %v565, %v1150
        %v1205 = vmul.f32 %v566, %v1155
        %v1206 = vmul.f32 %v567, %v1160
        %v1207 = vmul.f32 %v568, %v1165
        %v1208 = vmul.f32 %v569, %v1170
        %v1209 = vmul.f32 %v570, %v1175
        %v1210 = vmul.f32 %v571, %v1180
        %v1211 = vmul.f32 %v572, %v1185
        %v1212 = vmul.f32 %v573, %v1190
        %v1213 = vmul.f32 %v574, %v1195
        %v1214 = vadd.f32 %v1012, %v1198
        %v1215 = vadd.f32 %v1013, %v1199
        %v1216 = vadd.f32 %v1014, %v1200
        %v1217 = vadd.f32 %v1015, %v1201
        %v1218 = vadd.f32 %v1016, %v1202
        %v1219 = vadd.f32 %v1017, %v1203
        %v1220 = vadd.f32 %v1018, %v1204
        %v1221 = vadd.f32 %v1019, %v1205
        %v1222 = vadd.f32 %v1020, %v1206
        %v1223 = vadd.f32 %v1021, %v1207
        %v1224 = vadd.f32 %v1022, %v1208
        %v1225 = vadd.f32 %v1023, %v1209
        %v1226 = vadd.f32 %v1024, %v1210
        %v1227 = vadd.f32 %v1025, %v1211
        %v1228 = vadd.f32 %v1026, %v1212
        %v1229 = vadd.f32 %v1027, %v1213
        %v1230 = vld [vmem:[#allocation11] sm:$0xff]
        %v1231 = vld [vmem:[#allocation11 + $0x8] sm:$0xff]
        %v1232 = vld [vmem:[#allocation11 + $0x10] sm:$0xff]
        %v1233 = vld [vmem:[#allocation11 + $0x18] sm:$0xff]
        %v1234 = vld [vmem:[#allocation11 + $0x20] sm:$0xff]
        %v1235 = vld [vmem:[#allocation11 + $0x28] sm:$0xff]
        %v1236 = vld [vmem:[#allocation11 + $0x30] sm:$0xff]
        %v1237 = vld [vmem:[#allocation11 + $0x38] sm:$0xff]
        %v1238 = vld [vmem:[#allocation11 + $0x40] sm:$0xff]
        %v1239 = vld [vmem:[#allocation11 + $0x48] sm:$0xff]
        %v1240 = vld [vmem:[#allocation11 + $0x50] sm:$0xff]
        %v1241 = vld [vmem:[#allocation11 + $0x58] sm:$0xff]
        %v1242 = vld [vmem:[#allocation11 + $0x60] sm:$0xff]
        %v1243 = vld [vmem:[#allocation11 + $0x68] sm:$0xff]
        %v1244 = vld [vmem:[#allocation11 + $0x70] sm:$0xff]
        %v1245 = vld [vmem:[#allocation11 + $0x78] sm:$0xff]
        %v1246 = vld [vmem:[%s7] sm:$0x1]
        %v1248 = vlaneseq
        %v1249 = vshrl.u32 %v1248, 7
        %v1250 = vsub.s32 0, %v1249
        %v1251 = vrot.slane %v1246, %v1250
        %1253 = vmatprep.subr.mxu0 0.0
        %1254 = vmatpush1.msra.mxu0 %v1230
        %1255 = vmatprep.subr.mxu0 0.0
        %1256 = vmatpush1.msra.mxu0 %v1231
        %1257 = vmatprep.subr.mxu0 0.0
        %1258 = vmatpush1.msra.mxu0 %v1232
        %1259 = vmatprep.subr.mxu0 0.0
        %1260 = vmatpush1.msra.mxu0 %v1233
        %1261 = vmatprep.subr.mxu0 0.0
        %1262 = vmatpush1.msra.mxu0 %v1234
        %1263 = vmatprep.subr.mxu0 0.0
        %1264 = vmatpush1.msra.mxu0 %v1235
        %1265 = vmatprep.subr.mxu0 0.0
        %1266 = vmatpush1.msra.mxu0 %v1236
        %1267 = vmatprep.subr.mxu0 0.0
        %1268 = vmatpush1.msra.mxu0 %v1237
        %1269 = vmatprep.subr.mxu0 0.0
        %1270 = vmatpush1.msra.mxu0 %v1238
        %1271 = vmatprep.subr.mxu0 0.0
        %1272 = vmatpush1.msra.mxu0 %v1239
        %1273 = vmatprep.subr.mxu0 0.0
        %1274 = vmatpush1.msra.mxu0 %v1240
        %1275 = vmatprep.subr.mxu0 0.0
        %1276 = vmatpush1.msra.mxu0 %v1241
        %1277 = vmatprep.subr.mxu0 0.0
        %1278 = vmatpush1.msra.mxu0 %v1242
        %1279 = vmatprep.subr.mxu0 0.0
        %1280 = vmatpush1.msra.mxu0 %v1243
        %1281 = vmatprep.subr.mxu0 0.0
        %1282 = vmatpush1.msra.mxu0 %v1244
        %1283 = vmatprep.subr.mxu0 0.0
        %1284 = vmatpush1.msra.mxu0 %v1245
        %1285 = vmatprep.subr.mxu0 0.0
        %1286 = vmatpush1.msra.mxu0 0.0
        %1287 = vmatprep.subr.mxu0 0.0
        %1288 = vmatpush1.msra.mxu0 0.0
        %1289 = vmatprep.subr.mxu0 0.0
        %1290 = vmatpush1.msra.mxu0 0.0
        %1291 = vmatprep.subr.mxu0 0.0
        %1292 = vmatpush1.msra.mxu0 0.0
        %1293 = vmatprep.subr.mxu0 0.0
        %1294 = vmatpush1.msra.mxu0 0.0
        %1295 = vmatprep.subr.mxu0 0.0
        %1296 = vmatpush1.msra.mxu0 0.0
        %1297 = vmatprep.subr.mxu0 0.0
        %1298 = vmatpush1.msra.mxu0 0.0
        %1299 = vmatprep.subr.mxu0 0.0
        %1300 = vmatpush1.msra.mxu0 0.0
        %1301 = vmatprep.subr.mxu0 0.0
        %1302 = vmatpush1.msra.mxu0 0.0
        %1303 = vmatprep.subr.mxu0 0.0
        %1304 = vmatpush1.msra.mxu0 0.0
        %1305 = vmatprep.subr.mxu0 0.0
        %1306 = vmatpush1.msra.mxu0 0.0
        %1307 = vmatprep.subr.mxu0 0.0
        %1308 = vmatpush1.msra.mxu0 0.0
        %1309 = vmatprep.subr.mxu0 0.0
        %1310 = vmatpush1.msra.mxu0 0.0
        %1311 = vmatprep.subr.mxu0 0.0
        %1312 = vmatpush1.msra.mxu0 0.0
        %1313 = vmatprep.subr.mxu0 0.0
        %1314 = vmatpush1.msra.mxu0 0.0
        %1315 = vmatprep.subr.mxu0 0.0
        %1316 = vmatpush1.msra.mxu0 0.0
        %1317 = vmatprep.mubr.f32.mxu0 0.0
        %1318 = vmatmul.mubr.f32.gmra.mrb[0].mxu0 %v780
        %v1319 = vpop.f32.mrb[0].mxu0
        %v1320 = vadd.f32 %v1251, %v1319
        %v1321 = vpop.f32.mrb[0].mxu0
        %1322 = vmatprep.mubr.f32.mxu0 0.0
        %1323 = vmatmul.mubr.f32.gmra.mrb[0].mxu0 %v781
        %v1324 = vpop.f32.mrb[0].mxu0
        %v1325 = vadd.f32 %v1251, %v1324
        %v1326 = vpop.f32.mrb[0].mxu0
        %1327 = vmatprep.mubr.f32.mxu0 0.0
        %1328 = vmatmul.mubr.f32.gmra.mrb[0].mxu0 %v782
        %v1329 = vpop.f32.mrb[0].mxu0
        %v1330 = vadd.f32 %v1251, %v1329
        %v1331 = vpop.f32.mrb[0].mxu0
        %1332 = vmatprep.mubr.f32.mxu0 0.0
        %1333 = vmatmul.mubr.f32.gmra.mrb[0].mxu0 %v783
        %v1334 = vpop.f32.mrb[0].mxu0
        %v1335 = vadd.f32 %v1251, %v1334
        %v1336 = vpop.f32.mrb[0].mxu0
        %1337 = vmatprep.mubr.f32.mxu0 0.0
        %1338 = vmatmul.mubr.f32.gmra.mrb[0].mxu0 %v784
        %v1339 = vpop.f32.mrb[0].mxu0
        %v1340 = vadd.f32 %v1251, %v1339
        %v1341 = vpop.f32.mrb[0].mxu0
        %1342 = vmatprep.mubr.f32.mxu0 0.0
        %1343 = vmatmul.mubr.f32.gmra.mrb[0].mxu0 %v785
        %v1344 = vpop.f32.mrb[0].mxu0
        %v1345 = vadd.f32 %v1251, %v1344
        %v1346 = vpop.f32.mrb[0].mxu0
        %1347 = vmatprep.mubr.f32.mxu0 0.0
        %1348 = vmatmul.mubr.f32.gmra.mrb[0].mxu0 %v786
        %v1349 = vpop.f32.mrb[0].mxu0
        %v1350 = vadd.f32 %v1251, %v1349
        %v1351 = vpop.f32.mrb[0].mxu0
        %1352 = vmatprep.mubr.f32.mxu0 0.0
        %1353 = vmatmul.mubr.f32.gmra.mrb[0].mxu0 %v787
        %v1354 = vpop.f32.mrb[0].mxu0
        %v1355 = vadd.f32 %v1251, %v1354
        %v1356 = vpop.f32.mrb[0].mxu0
        %1357 = vmatprep.mubr.f32.mxu0 0.0
        %1358 = vmatmul.mubr.f32.gmra.mrb[0].mxu0 %v788
        %v1359 = vpop.f32.mrb[0].mxu0
        %v1360 = vadd.f32 %v1251, %v1359
        %v1361 = vpop.f32.mrb[0].mxu0
        %1362 = vmatprep.mubr.f32.mxu0 0.0
        %1363 = vmatmul.mubr.f32.gmra.mrb[0].mxu0 %v789
        %v1364 = vpop.f32.mrb[0].mxu0
        %v1365 = vadd.f32 %v1251, %v1364
        %v1366 = vpop.f32.mrb[0].mxu0
        %1367 = vmatprep.mubr.f32.mxu0 0.0
        %1368 = vmatmul.mubr.f32.gmra.mrb[0].mxu0 %v790
        %v1369 = vpop.f32.mrb[0].mxu0
        %v1370 = vadd.f32 %v1251, %v1369
        %v1371 = vpop.f32.mrb[0].mxu0
        %1372 = vmatprep.mubr.f32.mxu0 0.0
        %1373 = vmatmul.mubr.f32.gmra.mrb[0].mxu0 %v791
        %v1374 = vpop.f32.mrb[0].mxu0
        %v1375 = vadd.f32 %v1251, %v1374
        %v1376 = vpop.f32.mrb[0].mxu0
        %1377 = vmatprep.mubr.f32.mxu0 0.0
        %1378 = vmatmul.mubr.f32.gmra.mrb[0].mxu0 %v792
        %v1379 = vpop.f32.mrb[0].mxu0
        %v1380 = vadd.f32 %v1251, %v1379
        %v1381 = vpop.f32.mrb[0].mxu0
        %1382 = vmatprep.mubr.f32.mxu0 0.0
        %1383 = vmatmul.mubr.f32.gmra.mrb[0].mxu0 %v793
        %v1384 = vpop.f32.mrb[0].mxu0
        %v1385 = vadd.f32 %v1251, %v1384
        %v1386 = vpop.f32.mrb[0].mxu0
        %1387 = vmatprep.mubr.f32.mxu0 0.0
        %1388 = vmatmul.mubr.f32.gmra.mrb[0].mxu0 %v794
        %v1389 = vpop.f32.mrb[0].mxu0
        %v1390 = vadd.f32 %v1251, %v1389
        %v1391 = vpop.f32.mrb[0].mxu0
        %1392 = vmatprep.mubr.f32.mxu0 0.0
        %1393 = vmatmul.mubr.f32.gmra.mrb[0].mxu0 %v795
        %v1394 = vpop.f32.mrb[0].mxu0
        %v1395 = vadd.f32 %v1251, %v1394
        %v1396 = vpop.f32.mrb[0].mxu0
        %1397 = vdwg.mxu0
        %v1398 = vmax.f32 %v1320, 0.0
        %v1399 = vmax.f32 %v1325, 0.0
        %v1400 = vmax.f32 %v1330, 0.0
        %v1401 = vmax.f32 %v1335, 0.0
        %v1402 = vmax.f32 %v1340, 0.0
        %v1403 = vmax.f32 %v1345, 0.0
        %v1404 = vmax.f32 %v1350, 0.0
        %v1405 = vmax.f32 %v1355, 0.0
        %v1406 = vmax.f32 %v1360, 0.0
        %v1407 = vmax.f32 %v1365, 0.0
        %v1408 = vmax.f32 %v1370, 0.0
        %v1409 = vmax.f32 %v1375, 0.0
        %v1410 = vmax.f32 %v1380, 0.0
        %v1411 = vmax.f32 %v1385, 0.0
        %v1412 = vmax.f32 %v1390, 0.0
        %v1413 = vmax.f32 %v1395, 0.0
        %v1414 = vld [vmem:[#allocation12] sm:$0xff]
        %v1415 = vld [vmem:[#allocation12 + $0x8] sm:$0xff]
        %v1416 = vld [vmem:[#allocation12 + $0x10] sm:$0xff]
        %v1417 = vld [vmem:[#allocation12 + $0x18] sm:$0xff]
        %v1418 = vld [vmem:[#allocation12 + $0x20] sm:$0xff]
        %v1419 = vld [vmem:[#allocation12 + $0x28] sm:$0xff]
        %v1420 = vld [vmem:[#allocation12 + $0x30] sm:$0xff]
        %v1421 = vld [vmem:[#allocation12 + $0x38] sm:$0xff]
        %v1422 = vld [vmem:[#allocation12 + $0x40] sm:$0xff]
        %v1423 = vld [vmem:[#allocation12 + $0x48] sm:$0xff]
        %v1424 = vld [vmem:[#allocation12 + $0x50] sm:$0xff]
        %v1425 = vld [vmem:[#allocation12 + $0x58] sm:$0xff]
        %v1426 = vld [vmem:[#allocation12 + $0x60] sm:$0xff]
        %v1427 = vld [vmem:[#allocation12 + $0x68] sm:$0xff]
        %v1428 = vld [vmem:[#allocation12 + $0x70] sm:$0xff]
        %v1429 = vld [vmem:[#allocation12 + $0x78] sm:$0xff]
        %v1430 = vld [vmem:[%s9] sm:$0x1]
        %v1432 = vlaneseq
        %v1433 = vshrl.u32 %v1432, 7
        %v1434 = vsub.s32 0, %v1433
        %v1435 = vrot.slane %v1430, %v1434
        %1437 = vmatprep.subr.mxu0 0.0
        %1438 = vmatpush1.msra.mxu0 %v1414
        %1439 = vmatprep.subr.mxu0 0.0
        %1440 = vmatpush1.msra.mxu0 %v1415
        %1441 = vmatprep.subr.mxu0 0.0
        %1442 = vmatpush1.msra.mxu0 %v1416
        %1443 = vmatprep.subr.mxu0 0.0
        %1444 = vmatpush1.msra.mxu0 %v1417
        %1445 = vmatprep.subr.mxu0 0.0
        %1446 = vmatpush1.msra.mxu0 %v1418
        %1447 = vmatprep.subr.mxu0 0.0
        %1448 = vmatpush1.msra.mxu0 %v1419
        %1449 = vmatprep.subr.mxu0 0.0
        %1450 = vmatpush1.msra.mxu0 %v1420
        %1451 = vmatprep.subr.mxu0 0.0
        %1452 = vmatpush1.msra.mxu0 %v1421
        %1453 = vmatprep.subr.mxu0 0.0
        %1454 = vmatpush1.msra.mxu0 %v1422
        %1455 = vmatprep.subr.mxu0 0.0
        %1456 = vmatpush1.msra.mxu0 %v1423
        %1457 = vmatprep.subr.mxu0 0.0
        %1458 = vmatpush1.msra.mxu0 %v1424
        %1459 = vmatprep.subr.mxu0 0.0
        %1460 = vmatpush1.msra.mxu0 %v1425
        %1461 = vmatprep.subr.mxu0 0.0
        %1462 = vmatpush1.msra.mxu0 %v1426
        %1463 = vmatprep.subr.mxu0 0.0
        %1464 = vmatpush1.msra.mxu0 %v1427
        %1465 = vmatprep.subr.mxu0 0.0
        %1466 = vmatpush1.msra.mxu0 %v1428
        %1467 = vmatprep.subr.mxu0 0.0
        %1468 = vmatpush1.msra.mxu0 %v1429
        %1469 = vmatprep.subr.mxu0 0.0
        %1470 = vmatpush1.msra.mxu0 0.0
        %1471 = vmatprep.subr.mxu0 0.0
        %1472 = vmatpush1.msra.mxu0 0.0
        %1473 = vmatprep.subr.mxu0 0.0
        %1474 = vmatpush1.msra.mxu0 0.0
        %1475 = vmatprep.subr.mxu0 0.0
        %1476 = vmatpush1.msra.mxu0 0.0
        %1477 = vmatprep.subr.mxu0 0.0
        %1478 = vmatpush1.msra.mxu0 0.0
        %1479 = vmatprep.subr.mxu0 0.0
        %1480 = vmatpush1.msra.mxu0 0.0
        %1481 = vmatprep.subr.mxu0 0.0
        %1482 = vmatpush1.msra.mxu0 0.0
        %1483 = vmatprep.subr.mxu0 0.0
        %1484 = vmatpush1.msra.mxu0 0.0
        %1485 = vmatprep.subr.mxu0 0.0
        %1486 = vmatpush1.msra.mxu0 0.0
        %1487 = vmatprep.subr.mxu0 0.0
        %1488 = vmatpush1.msra.mxu0 0.0
        %1489 = vmatprep.subr.mxu0 0.0
        %1490 = vmatpush1.msra.mxu0 0.0
        %1491 = vmatprep.subr.mxu0 0.0
        %1492 = vmatpush1.msra.mxu0 0.0
        %1493 = vmatprep.subr.mxu0 0.0
        %1494 = vmatpush1.msra.mxu0 0.0
        %1495 = vmatprep.subr.mxu0 0.0
        %1496 = vmatpush1.msra.mxu0 0.0
        %1497 = vmatprep.subr.mxu0 0.0
        %1498 = vmatpush1.msra.mxu0 0.0
        %1499 = vmatprep.subr.mxu0 0.0
        %1500 = vmatpush1.msra.mxu0 0.0
        %1501 = vmatprep.mubr.f32.mxu0 0.0
        %1502 = vmatmul.mubr.f32.gmra.mrb[0].mxu0 %v1398
        %v1503 = vpop.f32.mrb[0].mxu0
        %v1504 = vadd.f32 %v1435, %v1503
        %v1505 = vpop.f32.mrb[0].mxu0
        %1506 = vmatprep.mubr.f32.mxu0 0.0
        %1507 = vmatmul.mubr.f32.gmra.mrb[0].mxu0 %v1399
        %v1508 = vpop.f32.mrb[0].mxu0
        %v1509 = vadd.f32 %v1435, %v1508
        %v1510 = vpop.f32.mrb[0].mxu0
        %1511 = vmatprep.mubr.f32.mxu0 0.0
        %1512 = vmatmul.mubr.f32.gmra.mrb[0].mxu0 %v1400
        %v1513 = vpop.f32.mrb[0].mxu0
        %v1514 = vadd.f32 %v1435, %v1513
        %v1515 = vpop.f32.mrb[0].mxu0
        %1516 = vmatprep.mubr.f32.mxu0 0.0
        %1517 = vmatmul.mubr.f32.gmra.mrb[0].mxu0 %v1401
        %v1518 = vpop.f32.mrb[0].mxu0
        %v1519 = vadd.f32 %v1435, %v1518
        %v1520 = vpop.f32.mrb[0].mxu0
        %1521 = vmatprep.mubr.f32.mxu0 0.0
        %1522 = vmatmul.mubr.f32.gmra.mrb[0].mxu0 %v1402
        %v1523 = vpop.f32.mrb[0].mxu0
        %v1524 = vadd.f32 %v1435, %v1523
        %v1525 = vpop.f32.mrb[0].mxu0
        %1526 = vmatprep.mubr.f32.mxu0 0.0
        %1527 = vmatmul.mubr.f32.gmra.mrb[0].mxu0 %v1403
        %v1528 = vpop.f32.mrb[0].mxu0
        %v1529 = vadd.f32 %v1435, %v1528
        %v1530 = vpop.f32.mrb[0].mxu0
        %1531 = vmatprep.mubr.f32.mxu0 0.0
        %1532 = vmatmul.mubr.f32.gmra.mrb[0].mxu0 %v1404
        %v1533 = vpop.f32.mrb[0].mxu0
        %v1534 = vadd.f32 %v1435, %v1533
        %v1535 = vpop.f32.mrb[0].mxu0
        %1536 = vmatprep.mubr.f32.mxu0 0.0
        %1537 = vmatmul.mubr.f32.gmra.mrb[0].mxu0 %v1405
        %v1538 = vpop.f32.mrb[0].mxu0
        %v1539 = vadd.f32 %v1435, %v1538
        %v1540 = vpop.f32.mrb[0].mxu0
        %1541 = vmatprep.mubr.f32.mxu0 0.0
        %1542 = vmatmul.mubr.f32.gmra.mrb[0].mxu0 %v1406
        %v1543 = vpop.f32.mrb[0].mxu0
        %v1544 = vadd.f32 %v1435, %v1543
        %v1545 = vpop.f32.mrb[0].mxu0
        %1546 = vmatprep.mubr.f32.mxu0 0.0
        %1547 = vmatmul.mubr.f32.gmra.mrb[0].mxu0 %v1407
        %v1548 = vpop.f32.mrb[0].mxu0
        %v1549 = vadd.f32 %v1435, %v1548
        %v1550 = vpop.f32.mrb[0].mxu0
        %1551 = vmatprep.mubr.f32.mxu0 0.0
        %1552 = vmatmul.mubr.f32.gmra.mrb[0].mxu0 %v1408
        %v1553 = vpop.f32.mrb[0].mxu0
        %v1554 = vadd.f32 %v1435, %v1553
        %v1555 = vpop.f32.mrb[0].mxu0
        %1556 = vmatprep.mubr.f32.mxu0 0.0
        %1557 = vmatmul.mubr.f32.gmra.mrb[0].mxu0 %v1409
        %v1558 = vpop.f32.mrb[0].mxu0
        %v1559 = vadd.f32 %v1435, %v1558
        %v1560 = vpop.f32.mrb[0].mxu0
        %1561 = vmatprep.mubr.f32.mxu0 0.0
        %1562 = vmatmul.mubr.f32.gmra.mrb[0].mxu0 %v1410
        %v1563 = vpop.f32.mrb[0].mxu0
        %v1564 = vadd.f32 %v1435, %v1563
        %v1565 = vpop.f32.mrb[0].mxu0
        %1566 = vmatprep.mubr.f32.mxu0 0.0
        %1567 = vmatmul.mubr.f32.gmra.mrb[0].mxu0 %v1411
        %v1568 = vpop.f32.mrb[0].mxu0
        %v1569 = vadd.f32 %v1435, %v1568
        %v1570 = vpop.f32.mrb[0].mxu0
        %1571 = vmatprep.mubr.f32.mxu0 0.0
        %1572 = vmatmul.mubr.f32.gmra.mrb[0].mxu0 %v1412
        %v1573 = vpop.f32.mrb[0].mxu0
        %v1574 = vadd.f32 %v1435, %v1573
        %v1575 = vpop.f32.mrb[0].mxu0
        %1576 = vmatprep.mubr.f32.mxu0 0.0
        %1577 = vmatmul.mubr.f32.gmra.mrb[0].mxu0 %v1413
        %v1578 = vpop.f32.mrb[0].mxu0
        %v1579 = vadd.f32 %v1435, %v1578
        %v1580 = vpop.f32.mrb[0].mxu0
        %1581 = vdwg.mxu0
        %v1582 = vmax.f32 %v1504, 0.0
        %v1583 = vmax.f32 %v1509, 0.0
        %v1584 = vmax.f32 %v1514, 0.0
        %v1585 = vmax.f32 %v1519, 0.0
        %v1586 = vmax.f32 %v1524, 0.0
        %v1587 = vmax.f32 %v1529, 0.0
        %v1588 = vmax.f32 %v1534, 0.0
        %v1589 = vmax.f32 %v1539, 0.0
        %v1590 = vmax.f32 %v1544, 0.0
        %v1591 = vmax.f32 %v1549, 0.0
        %v1592 = vmax.f32 %v1554, 0.0
        %v1593 = vmax.f32 %v1559, 0.0
        %v1594 = vmax.f32 %v1564, 0.0
        %v1595 = vmax.f32 %v1569, 0.0
        %v1596 = vmax.f32 %v1574, 0.0
        %v1597 = vmax.f32 %v1579, 0.0
        %v1598 = vld [vmem:[%s10] sm:$0x1]
        %v1600 = vlaneseq
        %v1601 = vshrl.u32 %v1600, 7
        %v1602 = vsub.s32 0, %v1601
        %v1603 = vrot.slane %v1598, %v1602
        %v1605 = vmul.f32 %v1214, %v1603
        %v1606 = vmul.f32 %v1215, %v1603
        %v1607 = vmul.f32 %v1216, %v1603
        %v1608 = vmul.f32 %v1217, %v1603
        %v1609 = vmul.f32 %v1218, %v1603
        %v1610 = vmul.f32 %v1219, %v1603
        %v1611 = vmul.f32 %v1220, %v1603
        %v1612 = vmul.f32 %v1221, %v1603
        %v1613 = vmul.f32 %v1222, %v1603
        %v1614 = vmul.f32 %v1223, %v1603
        %v1615 = vmul.f32 %v1224, %v1603
        %v1616 = vmul.f32 %v1225, %v1603
        %v1617 = vmul.f32 %v1226, %v1603
        %v1618 = vmul.f32 %v1227, %v1603
        %v1619 = vmul.f32 %v1228, %v1603
        %v1620 = vmul.f32 %v1229, %v1603
        %1621 = vadd.xlane.f32.xlu0 %v1605
        %v1622 = vpop.xlane.xlu0 %1621
        %1623 = vadd.xlane.f32.xlu0 %v1606
        %v1624 = vpop.xlane.xlu0 %1623
        %1625 = vadd.xlane.f32.xlu0 %v1607
        %v1626 = vpop.xlane.xlu0 %1625
        %1627 = vadd.xlane.f32.xlu0 %v1608
        %v1628 = vpop.xlane.xlu0 %1627
        %1629 = vadd.xlane.f32.xlu0 %v1609
        %v1630 = vpop.xlane.xlu0 %1629
        %1631 = vadd.xlane.f32.xlu0 %v1610
        %v1632 = vpop.xlane.xlu0 %1631
        %1633 = vadd.xlane.f32.xlu0 %v1611
        %v1634 = vpop.xlane.xlu0 %1633
        %1635 = vadd.xlane.f32.xlu0 %v1612
        %v1636 = vpop.xlane.xlu0 %1635
        %1637 = vadd.xlane.f32.xlu0 %v1613
        %v1638 = vpop.xlane.xlu0 %1637
        %1639 = vadd.xlane.f32.xlu0 %v1614
        %v1640 = vpop.xlane.xlu0 %1639
        %1641 = vadd.xlane.f32.xlu0 %v1615
        %v1642 = vpop.xlane.xlu0 %1641
        %1643 = vadd.xlane.f32.xlu0 %v1616
        %v1644 = vpop.xlane.xlu0 %1643
        %1645 = vadd.xlane.f32.xlu0 %v1617
        %v1646 = vpop.xlane.xlu0 %1645
        %1647 = vadd.xlane.f32.xlu0 %v1618
        %v1648 = vpop.xlane.xlu0 %1647
        %1649 = vadd.xlane.f32.xlu0 %v1619
        %v1650 = vpop.xlane.xlu0 %1649
        %1651 = vadd.xlane.f32.xlu0 %v1620
        %v1652 = vpop.xlane.xlu0 %1651
        %v1653 = vld [vmem:[%s11] sm:$0x1]
        %v1655 = vlaneseq
        %v1656 = vshrl.u32 %v1655, 7
        %v1657 = vsub.s32 0, %v1656
        %v1658 = vrot.slane %v1653, %v1657
        %v1660 = vmul.f32 %v1582, %v1658
        %v1661 = vmul.f32 %v1583, %v1658
        %v1662 = vmul.f32 %v1584, %v1658
        %v1663 = vmul.f32 %v1585, %v1658
        %v1664 = vmul.f32 %v1586, %v1658
        %v1665 = vmul.f32 %v1587, %v1658
        %v1666 = vmul.f32 %v1588, %v1658
        %v1667 = vmul.f32 %v1589, %v1658
        %v1668 = vmul.f32 %v1590, %v1658
        %v1669 = vmul.f32 %v1591, %v1658
        %v1670 = vmul.f32 %v1592, %v1658
        %v1671 = vmul.f32 %v1593, %v1658
        %v1672 = vmul.f32 %v1594, %v1658
        %v1673 = vmul.f32 %v1595, %v1658
        %v1674 = vmul.f32 %v1596, %v1658
        %v1675 = vmul.f32 %v1597, %v1658
        %1676 = vadd.xlane.f32.xlu0 %v1660
        %v1677 = vpop.xlane.xlu0 %1676
        %1678 = vadd.xlane.f32.xlu0 %v1661
        %v1679 = vpop.xlane.xlu0 %1678
        %1680 = vadd.xlane.f32.xlu0 %v1662
        %v1681 = vpop.xlane.xlu0 %1680
        %1682 = vadd.xlane.f32.xlu0 %v1663
        %v1683 = vpop.xlane.xlu0 %1682
        %1684 = vadd.xlane.f32.xlu0 %v1664
        %v1685 = vpop.xlane.xlu0 %1684
        %1686 = vadd.xlane.f32.xlu0 %v1665
        %v1687 = vpop.xlane.xlu0 %1686
        %1688 = vadd.xlane.f32.xlu0 %v1666
        %v1689 = vpop.xlane.xlu0 %1688
        %1690 = vadd.xlane.f32.xlu0 %v1667
        %v1691 = vpop.xlane.xlu0 %1690
        %1692 = vadd.xlane.f32.xlu0 %v1668
        %v1693 = vpop.xlane.xlu0 %1692
        %1694 = vadd.xlane.f32.xlu0 %v1669
        %v1695 = vpop.xlane.xlu0 %1694
        %1696 = vadd.xlane.f32.xlu0 %v1670
        %v1697 = vpop.xlane.xlu0 %1696
        %1698 = vadd.xlane.f32.xlu0 %v1671
        %v1699 = vpop.xlane.xlu0 %1698
        %1700 = vadd.xlane.f32.xlu0 %v1672
        %v1701 = vpop.xlane.xlu0 %1700
        %1702 = vadd.xlane.f32.xlu0 %v1673
        %v1703 = vpop.xlane.xlu0 %1702
        %1704 = vadd.xlane.f32.xlu0 %v1674
        %v1705 = vpop.xlane.xlu0 %1704
        %1706 = vadd.xlane.f32.xlu0 %v1675
        %v1707 = vpop.xlane.xlu0 %1706
        %v1708 = vadd.f32 %v1622, %v1677
        %v1709 = vadd.f32 %v1624, %v1679
        %v1710 = vadd.f32 %v1626, %v1681
        %v1711 = vadd.f32 %v1628, %v1683
        %v1712 = vadd.f32 %v1630, %v1685
        %v1713 = vadd.f32 %v1632, %v1687
        %v1714 = vadd.f32 %v1634, %v1689
        %v1715 = vadd.f32 %v1636, %v1691
        %v1716 = vadd.f32 %v1638, %v1693
        %v1717 = vadd.f32 %v1640, %v1695
        %v1718 = vadd.f32 %v1642, %v1697
        %v1719 = vadd.f32 %v1644, %v1699
        %v1720 = vadd.f32 %v1646, %v1701
        %v1721 = vadd.f32 %v1648, %v1703
        %v1722 = vadd.f32 %v1650, %v1705
        %v1723 = vadd.f32 %v1652, %v1707
        %v1724 = vld [vmem:[%s494] sm:$0xff]
        %v1725 = vld [vmem:[%s494 + $0x8] sm:$0xff]
        %v1726 = vld [vmem:[%s494 + $0x10] sm:$0xff]
        %v1727 = vld [vmem:[%s494 + $0x18] sm:$0xff]
        %v1728 = vld [vmem:[%s494 + $0x20] sm:$0xff]
        %v1729 = vld [vmem:[%s494 + $0x28] sm:$0xff]
        %v1730 = vld [vmem:[%s494 + $0x30] sm:$0xff]
        %v1731 = vld [vmem:[%s494 + $0x38] sm:$0xff]
        %v1732 = vld [vmem:[%s494 + $0x40] sm:$0xff]
        %v1733 = vld [vmem:[%s494 + $0x48] sm:$0xff]
        %v1734 = vld [vmem:[%s494 + $0x50] sm:$0xff]
        %v1735 = vld [vmem:[%s494 + $0x58] sm:$0xff]
        %v1736 = vld [vmem:[%s494 + $0x60] sm:$0xff]
        %v1737 = vld [vmem:[%s494 + $0x68] sm:$0xff]
        %v1738 = vld [vmem:[%s494 + $0x70] sm:$0xff]
        %v1739 = vld [vmem:[%s494 + $0x78] sm:$0xff]
        %1740 = vadd.xlane.f32.xlu0 %v1724
        %v1741 = vpop.xlane.xlu0 %1740
        %1742 = vadd.xlane.f32.xlu0 %v1725
        %v1743 = vpop.xlane.xlu0 %1742
        %1744 = vadd.xlane.f32.xlu0 %v1726
        %v1745 = vpop.xlane.xlu0 %1744
        %1746 = vadd.xlane.f32.xlu0 %v1727
        %v1747 = vpop.xlane.xlu0 %1746
        %1748 = vadd.xlane.f32.xlu0 %v1728
        %v1749 = vpop.xlane.xlu0 %1748
        %1750 = vadd.xlane.f32.xlu0 %v1729
        %v1751 = vpop.xlane.xlu0 %1750
        %1752 = vadd.xlane.f32.xlu0 %v1730
        %v1753 = vpop.xlane.xlu0 %1752
        %1754 = vadd.xlane.f32.xlu0 %v1731
        %v1755 = vpop.xlane.xlu0 %1754
        %1756 = vadd.xlane.f32.xlu0 %v1732
        %v1757 = vpop.xlane.xlu0 %1756
        %1758 = vadd.xlane.f32.xlu0 %v1733
        %v1759 = vpop.xlane.xlu0 %1758
        %1760 = vadd.xlane.f32.xlu0 %v1734
        %v1761 = vpop.xlane.xlu0 %1760
        %1762 = vadd.xlane.f32.xlu0 %v1735
        %v1763 = vpop.xlane.xlu0 %1762
        %1764 = vadd.xlane.f32.xlu0 %v1736
        %v1765 = vpop.xlane.xlu0 %1764
        %1766 = vadd.xlane.f32.xlu0 %v1737
        %v1767 = vpop.xlane.xlu0 %1766
        %1768 = vadd.xlane.f32.xlu0 %v1738
        %v1769 = vpop.xlane.xlu0 %1768
        %1770 = vadd.xlane.f32.xlu0 %v1739
        %v1771 = vpop.xlane.xlu0 %1770
        %v1772 = vadd.f32 %v1708, %v1741
        %v1773 = vadd.f32 %v1709, %v1743
        %v1774 = vadd.f32 %v1710, %v1745
        %v1775 = vadd.f32 %v1711, %v1747
        %v1776 = vadd.f32 %v1712, %v1749
        %v1777 = vadd.f32 %v1713, %v1751
        %v1778 = vadd.f32 %v1714, %v1753
        %v1779 = vadd.f32 %v1715, %v1755
        %v1780 = vadd.f32 %v1716, %v1757
        %v1781 = vadd.f32 %v1717, %v1759
        %v1782 = vadd.f32 %v1718, %v1761
        %v1783 = vadd.f32 %v1719, %v1763
        %v1784 = vadd.f32 %v1720, %v1765
        %v1785 = vadd.f32 %v1721, %v1767
        %v1786 = vadd.f32 %v1722, %v1769
        %v1787 = vadd.f32 %v1723, %v1771
        %s1788 = sld [smem:[#allocation2]]
        %v1789 = vstv %s1788
        %v1790 = vadd.f32 %v1772, %v1789
        %v1791 = vadd.f32 %v1773, %v1789
        %v1792 = vadd.f32 %v1774, %v1789
        %v1793 = vadd.f32 %v1775, %v1789
        %v1794 = vadd.f32 %v1776, %v1789
        %v1795 = vadd.f32 %v1777, %v1789
        %v1796 = vadd.f32 %v1778, %v1789
        %v1797 = vadd.f32 %v1779, %v1789
        %v1798 = vadd.f32 %v1780, %v1789
        %v1799 = vadd.f32 %v1781, %v1789
        %v1800 = vadd.f32 %v1782, %v1789
        %v1801 = vadd.f32 %v1783, %v1789
        %v1802 = vadd.f32 %v1784, %v1789
        %v1803 = vadd.f32 %v1785, %v1789
        %v1804 = vadd.f32 %v1786, %v1789
        %v1805 = vadd.f32 %v1787, %v1789
        %v1806 = vxor.u32 %v1790, 2147483648
        %v1807 = vxor.u32 %v1791, 2147483648
        %v1808 = vxor.u32 %v1792, 2147483648
        %v1809 = vxor.u32 %v1793, 2147483648
        %v1810 = vxor.u32 %v1794, 2147483648
        %v1811 = vxor.u32 %v1795, 2147483648
        %v1812 = vxor.u32 %v1796, 2147483648
        %v1813 = vxor.u32 %v1797, 2147483648
        %v1814 = vxor.u32 %v1798, 2147483648
        %v1815 = vxor.u32 %v1799, 2147483648
        %v1816 = vxor.u32 %v1800, 2147483648
        %v1817 = vxor.u32 %v1801, 2147483648
        %v1818 = vxor.u32 %v1802, 2147483648
        %v1819 = vxor.u32 %v1803, 2147483648
        %v1820 = vxor.u32 %v1804, 2147483648
        %v1821 = vxor.u32 %v1805, 2147483648
        %v1822 = vmul.f32 %v1806, 1.442695
        %v1823 = vpow.pop %v1822
        %v1824 = vmul.f32 %v1807, 1.442695
        %v1825 = vpow.pop %v1824
        %v1826 = vmul.f32 %v1808, 1.442695
        %v1827 = vpow.pop %v1826
        %v1828 = vmul.f32 %v1809, 1.442695
        %v1829 = vpow.pop %v1828
        %v1830 = vmul.f32 %v1810, 1.442695
        %v1831 = vpow.pop %v1830
        %v1832 = vmul.f32 %v1811, 1.442695
        %v1833 = vpow.pop %v1832
        %v1834 = vmul.f32 %v1812, 1.442695
        %v1835 = vpow.pop %v1834
        %v1836 = vmul.f32 %v1813, 1.442695
        %v1837 = vpow.pop %v1836
        %v1838 = vmul.f32 %v1814, 1.442695
        %v1839 = vpow.pop %v1838
        %v1840 = vmul.f32 %v1815, 1.442695
        %v1841 = vpow.pop %v1840
        %v1842 = vmul.f32 %v1816, 1.442695
        %v1843 = vpow.pop %v1842
        %v1844 = vmul.f32 %v1817, 1.442695
        %v1845 = vpow.pop %v1844
        %v1846 = vmul.f32 %v1818, 1.442695
        %v1847 = vpow.pop %v1846
        %v1848 = vmul.f32 %v1819, 1.442695
        %v1849 = vpow.pop %v1848
        %v1850 = vmul.f32 %v1820, 1.442695
        %v1851 = vpow.pop %v1850
        %v1852 = vmul.f32 %v1821, 1.442695
        %v1853 = vpow.pop %v1852
        %v1854 = vadd.f32 %v1823, 1.0
        %v1855 = vadd.f32 %v1825, 1.0
        %v1856 = vadd.f32 %v1827, 1.0
        %v1857 = vadd.f32 %v1829, 1.0
        %v1858 = vadd.f32 %v1831, 1.0
        %v1859 = vadd.f32 %v1833, 1.0
        %v1860 = vadd.f32 %v1835, 1.0
        %v1861 = vadd.f32 %v1837, 1.0
        %v1862 = vadd.f32 %v1839, 1.0
        %v1863 = vadd.f32 %v1841, 1.0
        %v1864 = vadd.f32 %v1843, 1.0
        %v1865 = vadd.f32 %v1845, 1.0
        %v1866 = vadd.f32 %v1847, 1.0
        %v1867 = vadd.f32 %v1849, 1.0
        %v1868 = vadd.f32 %v1851, 1.0
        %v1869 = vadd.f32 %v1853, 1.0
        %v1870 = vrcp.pop %v1854
        %v1871 = vmul.f32 1.0, %v1870
        %v1872 = vrcp.pop %v1855
        %v1873 = vmul.f32 1.0, %v1872
        %v1874 = vrcp.pop %v1856
        %v1875 = vmul.f32 1.0, %v1874
        %v1876 = vrcp.pop %v1857
        %v1877 = vmul.f32 1.0, %v1876
        %v1878 = vrcp.pop %v1858
        %v1879 = vmul.f32 1.0, %v1878
        %v1880 = vrcp.pop %v1859
        %v1881 = vmul.f32 1.0, %v1880
        %v1882 = vrcp.pop %v1860
        %v1883 = vmul.f32 1.0, %v1882
        %v1884 = vrcp.pop %v1861
        %v1885 = vmul.f32 1.0, %v1884
        %v1886 = vrcp.pop %v1862
        %v1887 = vmul.f32 1.0, %v1886
        %v1888 = vrcp.pop %v1863
        %v1889 = vmul.f32 1.0, %v1888
        %v1890 = vrcp.pop %v1864
        %v1891 = vmul.f32 1.0, %v1890
        %v1892 = vrcp.pop %v1865
        %v1893 = vmul.f32 1.0, %v1892
        %v1894 = vrcp.pop %v1866
        %v1895 = vmul.f32 1.0, %v1894
        %v1896 = vrcp.pop %v1867
        %v1897 = vmul.f32 1.0, %v1896
        %v1898 = vrcp.pop %v1868
        %v1899 = vmul.f32 1.0, %v1898
        %v1900 = vrcp.pop %v1869
        %v1901 = vmul.f32 1.0, %v1900
        %1902 = vxpose.xlu0.b32.start [1/16] %v1871, 128
        %1903 = vxpose.xlu0.b32.cont [2/16] %v1873, 128
        %1904 = vxpose.xlu0.b32.cont [3/16] %v1875, 128
        %1905 = vxpose.xlu0.b32.cont [4/16] %v1877, 128
        %1906 = vxpose.xlu0.b32.cont [5/16] %v1879, 128
        %1907 = vxpose.xlu0.b32.cont [6/16] %v1881, 128
        %1908 = vxpose.xlu0.b32.cont [7/16] %v1883, 128
        %1909 = vxpose.xlu0.b32.cont [8/16] %v1885, 128
        %1910 = vxpose.xlu0.b32.cont [9/16] %v1887, 128
        %1911 = vxpose.xlu0.b32.cont [10/16] %v1889, 128
        %1912 = vxpose.xlu0.b32.cont [11/16] %v1891, 128
        %1913 = vxpose.xlu0.b32.cont [12/16] %v1893, 128
        %1914 = vxpose.xlu0.b32.cont [13/16] %v1895, 128
        %1915 = vxpose.xlu0.b32.cont [14/16] %v1897, 128
        %1916 = vxpose.xlu0.b32.cont [15/16] %v1899, 128
        %1917 = vxpose.xlu0.b32.end [16/16] %v1901, 128
        %v1918 = vpop.trf.xlu0
        %v1919 = vpop.trf.xlu0
        %v1920 = vpop.trf.xlu0
        %v1921 = vpop.trf.xlu0
        %v1922 = vpop.trf.xlu0
        %v1923 = vpop.trf.xlu0
        %v1924 = vpop.trf.xlu0
        %v1925 = vpop.trf.xlu0
        %v1926 = vpop.trf.xlu0
        %v1927 = vpop.trf.xlu0
        %v1928 = vpop.trf.xlu0
        %v1929 = vpop.trf.xlu0
        %v1930 = vpop.trf.xlu0
        %v1931 = vpop.trf.xlu0
        %v1932 = vpop.trf.xlu0
        %v1933 = vpop.trf.xlu0
        %1934 = vst [vmem:[%s556] sm:$0x1] %v1918
        %s1935 = sand.u32 %s327, 1
        %s1936 = scalar_lea.sflag [#allocation5], %s1935
        %s1937 = sand.u32 %s327, 1
        %s1938 = scalar_lea.vmem [#allocation14], %s1937
        // Predicated region
        $region97: #{tpu_custom_call.1} parent=71 // pred_check
          %p1939 = pneg %p337
        $region98: #{tpu_custom_call.1} parent=71 // pred_check_branch
          %1941 = sbr.rel (%p1939) target = $region100
        $region99: #{tpu_custom_call.1} parent=71 // pred_region
          %s1943 = ssub.s32 16, 16
          %1944 = vsyncadd %s1936, %s1943
          %s1945 = smul.addr %s36, 16
          %s1946 = scalar_lea.hbm %s13, %s1945
          %s1948 = sshll.u32 %s1938, 4
          %s1949 = int_to_ptr.vmem [resolvable:$true] %s1948
          %1951 = dma.vmem_to_hbm [thread:$0]  %s1949, 16, %s1946, %s1936
        $region100: #{tpu_custom_call.1} parent=71 // pred_fallthru
          _
      $region72: #{tpu_custom_call.1} parent=5 // pred_fallthru
        _
      %p1952 = scmp.le.s32.totalorder 2, %s31
      // Predicated region
      $region101: #{tpu_custom_call.1} parent=5 // pred_check
        %p1953 = pneg %p1952
      $region102: #{tpu_custom_call.1} parent=5 // pred_check_branch
        %1955 = sbr.rel (%p1953) target = $region104
      $region103: #{tpu_custom_call.1} parent=5 // pred_region
        %s1956 = ssub.s32 %s31, 2
        // Predicated region
        $region105: #{tpu_custom_call.1} parent=103 // pred_check
          %p1957 = pneg %p343
        $region106: #{tpu_custom_call.1} parent=103 // pred_check_branch
          %1959 = sbr.rel (%p1957) target = $region108
        $region107: #{tpu_custom_call.1} parent=103 // pred_region
          %s1960 = sand.u32 %s328, 1
          %s1961 = scalar_lea.sflag [#allocation5], %s1960
          %s1962 = sand.u32 %s328, 1
          %s1963 = scalar_lea.vmem [#allocation14], %s1962
          %1964 = dma.done %s1961, 16
        $region108: #{tpu_custom_call.1} parent=103 // pred_fallthru
          _
      $region104: #{tpu_custom_call.1} parent=5 // pred_fallthru
        _
    $region6: #{tpu_custom_call.1} parent=1 // loop_footer
      %s35 = sadd.s32 1, %s31
    $region7: #{tpu_custom_call.1} parent=1 // loop_footer_branch
      %30 = sbr.rel target = $region3
    $region8: #{tpu_custom_call.1} parent=1 // loop_exit
      _
    %1965 = vsyncpa [#allocation4], 1
    %s1966 = scalar_lea.sflag [#allocation4], 1
    %1967 = vsyncpa %s1966, 1
    %1968 = vsyncpa [#allocation7], 1
    %s1969 = scalar_lea.sflag [#allocation7], 1
    %1970 = vsyncpa %s1969, 1
    %1971 = vsyncpa [#allocation10], 1
    %1972 = vsyncpa [#allocation13], 1
    %1973 = vsyncpa [#allocation5], 1
    %s1974 = scalar_lea.sflag [#allocation5], 1
    %1975 = vsyncpa %s1974, 1

</llo_original>
